<compile_context>
chip_gen: v5e
topology: v5e:2x2
jax: 0.10.0
libtpu: 0.0.40
codegen_flags: <defaults>
</compile_context>

<pallas_src>
import functools
import math

import jax
import jax.numpy as jnp
from jax import lax
from jax.experimental import pallas as pl
from jax.experimental.pallas import tpu as pltpu


def _round_up(x, m):
    return ((x + m - 1) // m) * m


# ----------------------------------------------------------------------------
# Pallas kernel: per-batch reduction over training points M (padded, tiled).
# Outputs are revisited across the m axis and used directly as accumulators.
# ----------------------------------------------------------------------------
def _gdml_core_kernel(xs_ref, jac_ref, xst_ref, a_ref,      # inputs
                      gx_ref, es_ref, h_ref,                # outputs (accumulators)
                      e_acc, s_acc,                         # tiny scalar scratch
                      *, q):
    mt = pl.program_id(1)

    @pl.when(mt == 0)
    def _():
        gx_ref[...] = jnp.zeros_like(gx_ref)
        h_ref[...] = jnp.zeros_like(h_ref)
        e_acc[...] = jnp.zeros_like(e_acc)
        s_acc[...] = jnp.zeros_like(s_acc)

    xs = xs_ref[0]            # (1, Dp)
    J = jac_ref[0]            # (Dp, Xp)
    xst = xst_ref[...]        # (TM, Dp)
    A = a_ref[...]            # (TM, Dp)

    x_diffs = xs - xst                                                   # (TM, Dp)
    sumsq = jnp.sum(x_diffs * x_diffs, axis=-1, keepdims=True)           # (TM, 1)
    inv_dist = lax.rsqrt(sumsq + 1e-30)                                  # EUP
    x_dists = sumsq * inv_dist                                           # (TM, 1)
    XA = jnp.sum(x_diffs * A, axis=-1, keepdims=True)                    # (TM, 1)
    exp_fac = (q ** 4 / 3.0) * jnp.exp(-q * x_dists)                     # (TM, 1)
    f1 = exp_fac * (1.0 + q * x_dists) * (1.0 / (q * q))                 # (TM, 1)

    fXA = f1 * XA                                                        # (TM, 1)
    eXA = exp_fac * XA                                                   # (TM, 1)

    # Scalar accumulators (energy_raw, S = sum_m exp_fac*XA).
    e_acc[...] += jnp.sum(fXA, axis=0, keepdims=True)                    # (1, 1)
    s_acc[...] += jnp.sum(eXA, axis=0, keepdims=True)                    # (1, 1)

    # grad_x = sum_m f1*A - sum_m (exp_fac*XA) * x_diffs
    gx_ref[0] += jnp.sum(f1 * A - eXA * x_diffs, axis=0, keepdims=True)

    # Hessian core terms: two MXU m-contractions (third matmul fused as a sub).
    XJ = jnp.dot(x_diffs, J, preferred_element_type=jnp.float32)         # (TM, Xp)
    AJ = jnp.dot(A, J, preferred_element_type=jnp.float32)               # (TM, Xp)
    c1 = eXA * (q * inv_dist)                                            # (TM, 1)

    dn_m = (((0,), (0,)), ((), ()))   # contract over m (dim 0 of both operands)
    h_ref[0] += (
        lax.dot_general(c1 * XJ - exp_fac * AJ, XJ, dn_m,
                        preferred_element_type=jnp.float32)
        - lax.dot_general(exp_fac * XJ, AJ, dn_m,
                          preferred_element_type=jnp.float32))

    @pl.when(mt == pl.num_programs(1) - 1)
    def _():
        # M-independent term fused here:  hess -= S * (J^T J)  (J already in VMEM)
        JJ = lax.dot_general(J, J, (((0,), (0,)), ((), ())),
                             preferred_element_type=jnp.float32)         # (Xp, Xp)
        h_ref[0] = h_ref[0] - s_acc[...] * JJ
        # Lane-dense packed scalar output: lane 0 = energy (unscaled), lane 1 = S.
        lane = lax.broadcasted_iota(jnp.int32, (1, 128), 1)
        es_ref[0] = jnp.where(lane == 0, e_acc[...],
                              jnp.where(lane == 1, s_acc[...], 0.0))


def gdml_core(xs, jac, xs_train, Jx_alphas, q, *, tm=512):
    """Pallas call.

    Returns (energy_raw (B,), grad_x (B,D), hess (B,X,X)); hess already
    includes the  - S * J^T J  term.
    """
    B, D = xs.shape
    X = jac.shape[-1]
    M = xs_train.shape[0]

    Dp = _round_up(D, 128)            # lane-dense descriptor dim
    Xp = _round_up(X, 128)            # lane-dense cartesian dim

    # Size the training tile from the actual per-core VMEM capacity.
    try:
        vmem_cap = int(pltpu.get_tpu_info().vmem_capacity_bytes)
    except Exception:
        vmem_cap = 64 << 20           # v7x floor if the query is unavailable

    def vmem_bytes(t):
        # double-buffered input/output blocks + tiny scalar scratch (f32)
        return 4 * (2 * Dp                 # xs
                    + 2 * Dp * Xp          # jacobian
                    + 2 * 2 * t * Dp       # xs_train + Jx_alphas tiles
                    + 2 * Dp               # grad output block
                    + 2 * 128              # packed energy/S output block
                    + 2 * Xp * Xp          # hess output block
                    + 2 * 8 * 128)         # scalar scratch padding slack

    tm = max(8, min(tm, _round_up(M, 8)))  # sublane multiple of 8
    budget = int(vmem_cap * 0.7)
    while tm > 8 and vmem_bytes(tm) > budget:
        tm = _round_up(tm // 2, 8)
    Mp = _round_up(M, tm)                  # ragged last tile -> zero-padded rows

    vmem_limit = int(min(max(vmem_bytes(tm) + (4 << 20), 32 << 20),
                         int(vmem_cap * 0.85)))

    f32 = jnp.float32
    xs_p = jnp.zeros((B, 1, Dp), f32).at[:, 0, :D].set(xs.astype(f32))
    jac_p = jnp.zeros((B, Dp, Xp), f32).at[:, :D, :X].set(jac.astype(f32))
    xst_p = jnp.zeros((Mp, Dp), f32).at[:M, :D].set(xs_train.astype(f32))
    a_p = jnp.zeros((Mp, Dp), f32).at[:M, :D].set(Jx_alphas.astype(f32))

    kernel = functools.partial(_gdml_core_kernel, q=q)
    gx, es, h = pl.pallas_call(
        kernel,
        out_shape=(
            jax.ShapeDtypeStruct((B, 1, Dp), f32),     # grad_x (padded lanes = 0)
            jax.ShapeDtypeStruct((B, 1, 128), f32),    # [energy, S, 0, ...]
            jax.ShapeDtypeStruct((B, Xp, Xp), f32),    # hess (padded rows/cols = 0)
        ),
        grid_spec=pltpu.PrefetchScalarGridSpec(
            num_scalar_prefetch=0,
            grid=(B, Mp // tm),
            in_specs=[
                pl.BlockSpec((1, 1, Dp), lambda b, m: (b, 0, 0)),   # xs
                pl.BlockSpec((1, Dp, Xp), lambda b, m: (b, 0, 0)),  # jacobian
                pl.BlockSpec((tm, Dp), lambda b, m: (m, 0)),        # xs_train tile
                pl.BlockSpec((tm, Dp), lambda b, m: (m, 0)),        # Jx_alphas tile
            ],
            out_specs=[
                pl.BlockSpec((1, 1, Dp), lambda b, m: (b, 0, 0)),
                pl.BlockSpec((1, 1, 128), lambda b, m: (b, 0, 0)),
                pl.BlockSpec((1, Xp, Xp), lambda b, m: (b, 0, 0)),
            ],
            scratch_shapes=[
                pltpu.VMEM((1, 1), f32),     # energy scalar accumulator
                pltpu.VMEM((1, 1), f32),     # S scalar accumulator
            ],
        ),
        compiler_params=pltpu.CompilerParams(
            dimension_semantics=("parallel", "arbitrary"),
            vmem_limit_bytes=vmem_limit),
    )(xs_p, jac_p, xst_p, a_p)

    energy_raw = es[:, 0, 0]
    grad_x = gx[:, 0, :D]
    hess = h[:, :X, :X]
    return energy_raw, grad_x, hess


# ----------------------------------------------------------------------------
# Full forward (order=2) with the Pallas kernel for the M-contractions.
# ----------------------------------------------------------------------------
def gdml_forward_pallas(r, xs_train, Jx_alphas, sig, c, std, n_atoms):
    hp = lax.Precision.HIGHEST
    B = r.shape[0]
    N = n_atoms
    D = Jx_alphas.shape[1]
    X = 3 * N
    q = math.sqrt(5.0) / sig

    r3 = r.reshape(B, N, 3)
    diffs = r3[:, :, None, :] - r3[:, None, :, :]            # (B,N,N,3)
    dists = jnp.linalg.norm(diffs, axis=-1)                  # (B,N,N)
    k, l = jnp.tril_indices(N, -1)                           # D strictly-lower pairs
    xs = 1.0 / dists[:, k, l]                                # (B,D)
    xs3 = xs ** 3

    # jacobian (B, D, N, 3)  -- irregular scatter kept in JAX glue
    kl = jnp.arange(D)
    jac = jnp.zeros((B, D, N, 3), jnp.float32)
    jac = jac.at[:, kl, k, :].set(-xs3[:, :, None] * diffs[:, k, l, :])
    jac = jac.at[:, kl, l, :].add(-xs3[:, :, None] * diffs[:, l, k, :])
    jac = jac.reshape(B, D, X)

    e_raw, grad_x, hess = gdml_core(xs, jac, xs_train, Jx_alphas, q)

    energy = e_raw * std + c
    grad = jnp.einsum('bd,bdx->bx', grad_x, jac, precision=hp) * std

    # Hessian tril corrections (index_put scatter)  -- JAX glue
    h1 = (3.0 * grad_x[:, :, None, None] * xs[:, :, None, None] ** 5
          * diffs[:, k, l, :, None] * diffs[:, k, l, None, :])   # (B,D,3,3)
    h2 = -grad_x * xs3                                           # (B,D)
    for u in range(3):
        for v in range(3):
            h1_uv = h1[:, :, u, v]
            hess = hess.at[:, 3 * k + u, 3 * l + v].add(-h1_uv)
            hess = hess.at[:, 3 * l + u, 3 * k + v].add(-h1_uv)
            hess = hess.at[:, 3 * k + u, 3 * k + v].add(h1_uv)
            hess = hess.at[:, 3 * l + u, 3 * l + v].add(h1_uv)
        hess = hess.at[:, 3 * k + u, 3 * l + u].add(-h2)
        hess = hess.at[:, 3 * l + u, 3 * k + u].add(-h2)
        hess = hess.at[:, 3 * k + u, 3 * k + u].add(h2)
        hess = hess.at[:, 3 * l + u, 3 * l + u].add(h2)
    hess = hess * std
    return energy, grad, hess


# ----------------------------------------------------------------------------
# Pure-JAX reference (direct translation of the PyTorch forward) for checking.
# ----------------------------------------------------------------------------
def gdml_forward_ref(r, xs_train, A, sig, c, std, n_atoms):
    hp = lax.Precision.HIGHEST
    B = r.shape[0]
    N = n_atoms
    D = A.shape[1]
    q = math.sqrt(5.0) / sig

    r3 = r.reshape(B, N, 3)
    diffs = r3[:, :, None, :] - r3[:, None, :, :]
    dists = jnp.linalg.norm(diffs, axis=-1)
    k, l = jnp.tril_indices(N, -1)
    xs = 1.0 / dists[:, k, l]
    x_diffs = xs[:, None, :] - xs_train
    x_dists = jnp.linalg.norm(x_diffs, axis=-1)
    XA = jnp.einsum('bmd,md->bm', x_diffs, A, precision=hp)
    exp_fac = (1.0 / 3.0) * q ** 4 * jnp.exp(-q * x_dists)
    energy = jnp.einsum('bm,bm->b', exp_fac * (1.0 + q * x_dists) / q ** 2, XA,
                        precision=hp)
    energy = energy * std + c

    xs3 = xs ** 3
    kl = jnp.arange(D)
    jac = jnp.zeros((B, D, N, 3), jnp.float32)
    jac = jac.at[:, kl, k, :].set(-xs3[:, :, None] * diffs[:, k, l, :])
    jac = jac.at[:, kl, l, :].add(-xs3[:, :, None] * diffs[:, l, k, :])
    jac = jac.reshape(B, D, 3 * N)

    grad_x = jnp.einsum('bm,md->bd', exp_fac * (1.0 + q * x_dists) / q ** 2, A,
                        precision=hp)
    grad_x = grad_x - jnp.einsum('bm,bmd->bd', exp_fac * XA, x_diffs, precision=hp)
    grad = jnp.einsum('bd,bdx->bx', grad_x, jac, precision=hp) * std

    XJ = jnp.einsum('bmd,bdx->bmx', x_diffs, jac, precision=hp)
    AJ = jnp.einsum('md,bdx->bmx', A, jac, precision=hp)
    JJ = jnp.einsum('bdx,bdy->bxy', jac, jac, precision=hp)
    hess = jnp.einsum('bm,bmx,bmy->bxy', exp_fac * XA * q / x_dists, XJ, XJ,
                      precision=hp)
    hess = hess - jnp.einsum('bm,bxy->bxy', exp_fac * XA, JJ, precision=hp)
    hess = hess - jnp.einsum('bm,bmx,bmy->bxy', exp_fac, AJ, XJ, precision=hp)
    hess = hess - jnp.einsum('bm,bmx,bmy->bxy', exp_fac, XJ, AJ, precision=hp)

    h1 = (3.0 * grad_x[:, :, None, None] * xs[:, :, None, None] ** 5
          * diffs[:, k, l, :, None] * diffs[:, k, l, None, :])
    h2 = -grad_x * xs3
    for u in range(3):
        for v in range(3):
            h1_uv = h1[:, :, u, v]
            hess = hess.at[:, 3 * k + u, 3 * l + v].add(-h1_uv)
            hess = hess.at[:, 3 * l + u, 3 * k + v].add(-h1_uv)
            hess = hess.at[:, 3 * k + u, 3 * k + v].add(h1_uv)
            hess = hess.at[:, 3 * l + u, 3 * l + v].add(h1_uv)
        hess = hess.at[:, 3 * k + u, 3 * l + u].add(-h2)
        hess = hess.at[:, 3 * l + u, 3 * k + u].add(-h2)
        hess = hess.at[:, 3 * k + u, 3 * k + u].add(h2)
        hess = hess.at[:, 3 * l + u, 3 * l + u].add(h2)
    hess = hess * std
    return energy, grad, hess


def _rel_err(a, b):
    return float(jnp.max(jnp.abs(a - b)) / (jnp.max(jnp.abs(b)) + 1e-12))


if __name__ == "__main__":
    # Small deterministic synthetic "model" (shapes as implied by __init__):
    #   n_atoms N = 5  -> D = N*(N-1)/2 = 10, 3N = 15
    #   n_train = 16, n_perms = 8 -> M = 128
    B, N = 2, 5
    D = N * (N - 1) // 2
    M = 128
    sig, c, std = 10, -97.25, 1.3

    key = jax.random.PRNGKey(0)
    k1, k2, k3 = jax.random.split(key, 3)

    xs_train = jax.random.uniform(k1, (M, D), jnp.float32, minval=0.4, maxval=2.0)
    Jx_alphas = jax.random.normal(k2, (M, D), jnp.float32)

    base = jnp.array([[0.0, 0.0, 0.0],
                      [1.8, 0.0, 0.0],
                      [0.0, 1.8, 0.0],
                      [0.0, 0.0, 1.8],
                      [1.2, 1.2, 1.2]], jnp.float32)
    r = (base[None] + 0.1 * jax.random.normal(k3, (B, N, 3), jnp.float32))
    r = r.reshape(B, 3 * N)

    energy, grad, hess = gdml_forward_pallas(r, xs_train, Jx_alphas, sig, c, std, N)
    jax.block_until_ready((energy, grad, hess))

    e_ref, g_ref, h_ref = gdml_forward_ref(r, xs_train, Jx_alphas, sig, c, std, N)
    jax.block_until_ready((e_ref, g_ref, h_ref))

    assert energy.shape == (B,) and grad.shape == (B, 3 * N) and hess.shape == (B, 3 * N, 3 * N)
    assert _rel_err(energy, e_ref) < 5e-3, _rel_err(energy, e_ref)
    assert _rel_err(grad, g_ref) < 5e-3, _rel_err(grad, g_ref)
    assert _rel_err(hess, h_ref) < 5e-3, _rel_err(hess, h_ref)

    print("KERNEL_OK")
</pallas_src>

<mosaic_0001>
module attributes {stable_mosaic.version = 11 : i64} {
  func.func @_gdml_core_kernel(%arg0: i32, %arg1: i32, %arg2: memref<1x1x128xf32, #tpu.memory_space<vmem>>, %arg3: memref<1x128x128xf32, #tpu.memory_space<vmem>>, %arg4: memref<128x128xf32, #tpu.memory_space<vmem>>, %arg5: memref<128x128xf32, #tpu.memory_space<vmem>>, %arg6: memref<1x1x128xf32, #tpu.memory_space<vmem>>, %arg7: memref<1x1x128xf32, #tpu.memory_space<vmem>>, %arg8: memref<1x128x128xf32, #tpu.memory_space<vmem>>, %arg9: memref<1x1xf32, #tpu.memory_space<vmem>>, %arg10: memref<1x1xf32, #tpu.memory_space<vmem>>) attributes {dimension_semantics = [#tpu.dimension_semantics<parallel>, #tpu.dimension_semantics<arbitrary>], iteration_bounds = array<i64: 2, 1>, scalar_prefetch = 0 : i64, scratch_operands = 2 : i64, tpu.core_type = #tpu.core_type<tc>, window_params = [{transform_indices = @transform_0, window_bounds = array<i64: 1, 1, 128>}, {transform_indices = @transform_1, window_bounds = array<i64: 1, 128, 128>}, {transform_indices = @transform_2, window_bounds = array<i64: 128, 128>}, {transform_indices = @transform_3, window_bounds = array<i64: 128, 128>}, {transform_indices = @transform_4, window_bounds = array<i64: 1, 1, 128>}, {transform_indices = @transform_5, window_bounds = array<i64: 1, 1, 128>}, {transform_indices = @transform_6, window_bounds = array<i64: 1, 128, 128>}]} {
    %c0_i32 = arith.constant 0 : i32
    %0 = arith.cmpi eq, %arg1, %c0_i32 : i32
    %1 = arith.extui %0 : i1 to i32
    %c0_i32_0 = arith.constant 0 : i32
    %2 = arith.cmpi ne, %1, %c0_i32_0 : i32
    scf.if %2 {
      %cst_47 = arith.constant 0.000000e+00 : f32
      %82 = vector.broadcast %cst_47 : f32 to vector<1x1x128xf32>
      %c0_48 = arith.constant 0 : index
      %c0_49 = arith.constant 0 : index
      %c0_50 = arith.constant 0 : index
      %83 = vector.load %arg6[%c0_48, %c0_49, %c0_50] : memref<1x1x128xf32, #tpu.memory_space<vmem>>, vector<1x1x128xf32>
      tpu.vector_store %arg6[%c0_48, %c0_49, %c0_50], %82 {strides = array<i32>} : memref<1x1x128xf32, #tpu.memory_space<vmem>>, vector<1x1x128xf32>,
      %cst_51 = arith.constant 0.000000e+00 : f32
      %84 = vector.broadcast %cst_51 : f32 to vector<1x128x128xf32>
      %c0_52 = arith.constant 0 : index
      %c0_53 = arith.constant 0 : index
      %c0_54 = arith.constant 0 : index
      %85 = vector.load %arg8[%c0_52, %c0_53, %c0_54] : memref<1x128x128xf32, #tpu.memory_space<vmem>>, vector<1x128x128xf32>
      tpu.vector_store %arg8[%c0_52, %c0_53, %c0_54], %84 {strides = array<i32>} : memref<1x128x128xf32, #tpu.memory_space<vmem>>, vector<1x128x128xf32>,
      %cst_55 = arith.constant 0.000000e+00 : f32
      %86 = vector.broadcast %cst_55 : f32 to vector<1x1xf32>
      %c0_56 = arith.constant 0 : index
      %c0_57 = arith.constant 0 : index
      %87 = vector.load %arg9[%c0_56, %c0_57] : memref<1x1xf32, #tpu.memory_space<vmem>>, vector<1x1xf32>
      tpu.vector_store %arg9[%c0_56, %c0_57], %86 {strides = array<i32>} : memref<1x1xf32, #tpu.memory_space<vmem>>, vector<1x1xf32>,
      %cst_58 = arith.constant 0.000000e+00 : f32
      %88 = vector.broadcast %cst_58 : f32 to vector<1x1xf32>
      %c0_59 = arith.constant 0 : index
      %c0_60 = arith.constant 0 : index
      %89 = vector.load %arg10[%c0_59, %c0_60] : memref<1x1xf32, #tpu.memory_space<vmem>>, vector<1x1xf32>
      tpu.vector_store %arg10[%c0_59, %c0_60], %88 {strides = array<i32>} : memref<1x1xf32, #tpu.memory_space<vmem>>, vector<1x1xf32>,
    } else {
    }
    %c0 = arith.constant 0 : index
    %c0_1 = arith.constant 0 : index
    %c0_2 = arith.constant 0 : index
    %3 = vector.load %arg2[%c0, %c0_1, %c0_2] : memref<1x1x128xf32, #tpu.memory_space<vmem>>, vector<1x1x128xf32>
    %4 = vector.shape_cast %3 : vector<1x1x128xf32> to vector<1x128xf32>
    %c0_3 = arith.constant 0 : index
    %c0_4 = arith.constant 0 : index
    %c0_5 = arith.constant 0 : index
    %5 = vector.load %arg3[%c0_3, %c0_4, %c0_5] : memref<1x128x128xf32, #tpu.memory_space<vmem>>, vector<1x128x128xf32>
    %6 = vector.shape_cast %5 : vector<1x128x128xf32> to vector<128x128xf32>
    %c0_6 = arith.constant 0 : index
    %c0_7 = arith.constant 0 : index
    %7 = vector.load %arg4[%c0_6, %c0_7] : memref<128x128xf32, #tpu.memory_space<vmem>>, vector<128x128xf32>
    %c0_8 = arith.constant 0 : index
    %c0_9 = arith.constant 0 : index
    %8 = vector.load %arg5[%c0_8, %c0_9] : memref<128x128xf32, #tpu.memory_space<vmem>>, vector<128x128xf32>
    %9 = vector.broadcast %4 : vector<1x128xf32> to vector<128x128xf32>
    %10 = arith.subf %9, %7 : vector<128x128xf32>
    %11 = arith.mulf %10, %10 : vector<128x128xf32>
    %cst = arith.constant dense<0.000000e+00> : vector<128xf32>
    %12 = vector.multi_reduction <add>, %11, %cst [1] : vector<128x128xf32> to vector<128xf32>
    %13 = vector.shape_cast %12 : vector<128xf32> to vector<128x1xf32>
    %cst_10 = arith.constant 1.000000e-30 : f32
    %14 = vector.broadcast %cst_10 : f32 to vector<128x1xf32>
    %15 = arith.addf %13, %14 : vector<128x1xf32>
    %16 = math.rsqrt %15 : vector<128x1xf32>
    %17 = arith.mulf %13, %16 : vector<128x1xf32>
    %18 = arith.mulf %10, %8 : vector<128x128xf32>
    %cst_11 = arith.constant dense<0.000000e+00> : vector<128xf32>
    %19 = vector.multi_reduction <add>, %18, %cst_11 [1] : vector<128x128xf32> to vector<128xf32>
    %20 = vector.shape_cast %19 : vector<128xf32> to vector<128x1xf32>
    %cst_12 = arith.constant -0.223606795 : f32
    %21 = vector.broadcast %cst_12 : f32 to vector<128x1xf32>
    %22 = arith.mulf %21, %17 : vector<128x1xf32>
    %23 = math.exp %22 : vector<128x1xf32>
    %cst_13 = arith.constant 8.33333353E-4 : f32
    %24 = vector.broadcast %cst_13 : f32 to vector<128x1xf32>
    %25 = arith.mulf %24, %23 : vector<128x1xf32>
    %cst_14 = arith.constant 0.223606795 : f32
    %26 = vector.broadcast %cst_14 : f32 to vector<128x1xf32>
    %27 = arith.mulf %26, %17 : vector<128x1xf32>
    %cst_15 = arith.constant 1.000000e+00 : f32
    %28 = vector.broadcast %cst_15 : f32 to vector<128x1xf32>
    %29 = arith.addf %28, %27 : vector<128x1xf32>
    %30 = arith.mulf %25, %29 : vector<128x1xf32>
    %cst_16 = arith.constant 2.000000e+01 : f32
    %31 = vector.broadcast %cst_16 : f32 to vector<128x1xf32>
    %32 = arith.mulf %30, %31 : vector<128x1xf32>
    %33 = arith.mulf %32, %20 : vector<128x1xf32>
    %34 = arith.mulf %25, %20 : vector<128x1xf32>
    %c0_17 = arith.constant 0 : index
    %c0_18 = arith.constant 0 : index
    %35 = vector.load %arg9[%c0_17, %c0_18] : memref<1x1xf32, #tpu.memory_space<vmem>>, vector<1x1xf32>
    %cst_19 = arith.constant dense<0.000000e+00> : vector<1xf32>
    %36 = vector.multi_reduction <add>, %33, %cst_19 [0] : vector<128x1xf32> to vector<1xf32>
    %37 = vector.shape_cast %36 : vector<1xf32> to vector<1x1xf32>
    %38 = arith.addf %35, %37 : vector<1x1xf32>
    %c0_20 = arith.constant 0 : index
    %c0_21 = arith.constant 0 : index
    %39 = vector.load %arg9[%c0_20, %c0_21] : memref<1x1xf32, #tpu.memory_space<vmem>>, vector<1x1xf32>
    tpu.vector_store %arg9[%c0_20, %c0_21], %38 {strides = array<i32>} : memref<1x1xf32, #tpu.memory_space<vmem>>, vector<1x1xf32>,
    %c0_22 = arith.constant 0 : index
    %c0_23 = arith.constant 0 : index
    %40 = vector.load %arg10[%c0_22, %c0_23] : memref<1x1xf32, #tpu.memory_space<vmem>>, vector<1x1xf32>
    %cst_24 = arith.constant dense<0.000000e+00> : vector<1xf32>
    %41 = vector.multi_reduction <add>, %34, %cst_24 [0] : vector<128x1xf32> to vector<1xf32>
    %42 = vector.shape_cast %41 : vector<1xf32> to vector<1x1xf32>
    %43 = arith.addf %40, %42 : vector<1x1xf32>
    %c0_25 = arith.constant 0 : index
    %c0_26 = arith.constant 0 : index
    %44 = vector.load %arg10[%c0_25, %c0_26] : memref<1x1xf32, #tpu.memory_space<vmem>>, vector<1x1xf32>
    tpu.vector_store %arg10[%c0_25, %c0_26], %43 {strides = array<i32>} : memref<1x1xf32, #tpu.memory_space<vmem>>, vector<1x1xf32>,
    %c0_27 = arith.constant 0 : index
    %c0_28 = arith.constant 0 : index
    %c0_29 = arith.constant 0 : index
    %45 = vector.load %arg6[%c0_27, %c0_28, %c0_29] : memref<1x1x128xf32, #tpu.memory_space<vmem>>, vector<1x1x128xf32>
    %46 = vector.shape_cast %45 : vector<1x1x128xf32> to vector<1x128xf32>
    %47 = vector.broadcast %32 : vector<128x1xf32> to vector<128x128xf32>
    %48 = arith.mulf %47, %8 : vector<128x128xf32>
    %49 = vector.broadcast %34 : vector<128x1xf32> to vector<128x128xf32>
    %50 = arith.mulf %49, %10 : vector<128x128xf32>
    %51 = arith.subf %48, %50 : vector<128x128xf32>
    %cst_30 = arith.constant dense<0.000000e+00> : vector<128xf32>
    %52 = vector.multi_reduction <add>, %51, %cst_30 [0] : vector<128x128xf32> to vector<128xf32>
    %53 = vector.shape_cast %52 : vector<128xf32> to vector<1x128xf32>
    %54 = arith.addf %46, %53 : vector<1x128xf32>
    %c0_31 = arith.constant 0 : index
    %c0_32 = arith.constant 0 : index
    %c0_33 = arith.constant 0 : index
    %55 = vector.load %arg6[%c0_31, %c0_32, %c0_33] : memref<1x1x128xf32, #tpu.memory_space<vmem>>, vector<1x1x128xf32>
    %56 = vector.shape_cast %55 : vector<1x1x128xf32> to vector<1x128xf32>
    %57 = vector.shape_cast %54 : vector<1x128xf32> to vector<1x1x128xf32>
    tpu.vector_store %arg6[%c0_31, %c0_32, %c0_33], %57 {strides = array<i32>} : memref<1x1x128xf32, #tpu.memory_space<vmem>>, vector<1x1x128xf32>,
    %cst_34 = arith.constant dense<0.000000e+00> : vector<128x128xf32>
    %58 = tpu.matmul %10, %6, %cst_34 {dimension_numbers = #tpu.dot_dimension_numbers<[1], [0], [0], [1], [0, 0, 1, 1], [], []>} : vector<128x128xf32>, vector<128x128xf32>, vector<128x128xf32> -> vector<128x128xf32>
    %cst_35 = arith.constant dense<0.000000e+00> : vector<128x128xf32>
    %59 = tpu.matmul %8, %6, %cst_35 {dimension_numbers = #tpu.dot_dimension_numbers<[1], [0], [0], [1], [0, 0, 1, 1], [], []>} : vector<128x128xf32>, vector<128x128xf32>, vector<128x128xf32> -> vector<128x128xf32>
    %cst_36 = arith.constant 0.223606795 : f32
    %60 = vector.broadcast %cst_36 : f32 to vector<128x1xf32>
    %61 = arith.mulf %60, %16 : vector<128x1xf32>
    %62 = arith.mulf %34, %61 : vector<128x1xf32>
    %c0_37 = arith.constant 0 : index
    %c0_38 = arith.constant 0 : index
    %c0_39 = arith.constant 0 : index
    %63 = vector.load %arg8[%c0_37, %c0_38, %c0_39] : memref<1x128x128xf32, #tpu.memory_space<vmem>>, vector<1x128x128xf32>
    %64 = vector.shape_cast %63 : vector<1x128x128xf32> to vector<128x128xf32>
    %65 = vector.broadcast %62 : vector<128x1xf32> to vector<128x128xf32>
    %66 = arith.mulf %65, %58 : vector<128x128xf32>
    %67 = vector.broadcast %25 : vector<128x1xf32> to vector<128x128xf32>
    %68 = arith.mulf %67, %59 : vector<128x128xf32>
    %69 = arith.subf %66, %68 : vector<128x128xf32>
    %cst_40 = arith.constant dense<0.000000e+00> : vector<128x128xf32>
    %70 = tpu.matmul %69, %58, %cst_40 {dimension_numbers = #tpu.dot_dimension_numbers<[0], [0], [1], [1], [0, 1, 1, 1], [], []>} : vector<128x128xf32>, vector<128x128xf32>, vector<128x128xf32> -> vector<128x128xf32>
    %71 = vector.broadcast %25 : vector<128x1xf32> to vector<128x128xf32>
    %72 = arith.mulf %71, %58 : vector<128x128xf32>
    %cst_41 = arith.constant dense<0.000000e+00> : vector<128x128xf32>
    %73 = tpu.matmul %72, %59, %cst_41 {dimension_numbers = #tpu.dot_dimension_numbers<[0], [0], [1], [1], [0, 1, 1, 1], [], []>} : vector<128x128xf32>, vector<128x128xf32>, vector<128x128xf32> -> vector<128x128xf32>
    %74 = arith.subf %70, %73 : vector<128x128xf32>
    %75 = arith.addf %64, %74 : vector<128x128xf32>
    %c0_42 = arith.constant 0 : index
    %c0_43 = arith.constant 0 : index
    %c0_44 = arith.constant 0 : index
    %76 = vector.load %arg8[%c0_42, %c0_43, %c0_44] : memref<1x128x128xf32, #tpu.memory_space<vmem>>, vector<1x128x128xf32>
    %77 = vector.shape_cast %76 : vector<1x128x128xf32> to vector<128x128xf32>
    %78 = vector.shape_cast %75 : vector<128x128xf32> to vector<1x128x128xf32>
    tpu.vector_store %arg8[%c0_42, %c0_43, %c0_44], %78 {strides = array<i32>} : memref<1x128x128xf32, #tpu.memory_space<vmem>>, vector<1x128x128xf32>,
    %c0_i32_45 = arith.constant 0 : i32
    %79 = arith.cmpi eq, %arg1, %c0_i32_45 : i32
    %80 = arith.extui %79 : i1 to i32
    %c0_i32_46 = arith.constant 0 : i32
    %81 = arith.cmpi ne, %80, %c0_i32_46 : i32
    scf.if %81 {
      %cst_47 = arith.constant dense<0.000000e+00> : vector<128x128xf32>
      %82 = tpu.matmul %6, %6, %cst_47 {dimension_numbers = #tpu.dot_dimension_numbers<[0], [0], [1], [1], [0, 1, 1, 1], [], []>} : vector<128x128xf32>, vector<128x128xf32>, vector<128x128xf32> -> vector<128x128xf32>
      %c0_48 = arith.constant 0 : index
      %c0_49 = arith.constant 0 : index
      %c0_50 = arith.constant 0 : index
      %83 = vector.load %arg8[%c0_48, %c0_49, %c0_50] : memref<1x128x128xf32, #tpu.memory_space<vmem>>, vector<1x128x128xf32>
      %84 = vector.shape_cast %83 : vector<1x128x128xf32> to vector<128x128xf32>
      %c0_51 = arith.constant 0 : index
      %c0_52 = arith.constant 0 : index
      %85 = vector.load %arg10[%c0_51, %c0_52] : memref<1x1xf32, #tpu.memory_space<vmem>>, vector<1x1xf32>
      %86 = vector.broadcast %85 : vector<1x1xf32> to vector<128x128xf32>
      %87 = arith.mulf %86, %82 : vector<128x128xf32>
      %88 = arith.subf %84, %87 : vector<128x128xf32>
      %c0_53 = arith.constant 0 : index
      %c0_54 = arith.constant 0 : index
      %c0_55 = arith.constant 0 : index
      %89 = vector.load %arg8[%c0_53, %c0_54, %c0_55] : memref<1x128x128xf32, #tpu.memory_space<vmem>>, vector<1x128x128xf32>
      %90 = vector.shape_cast %89 : vector<1x128x128xf32> to vector<128x128xf32>
      %91 = vector.shape_cast %88 : vector<128x128xf32> to vector<1x128x128xf32>
      tpu.vector_store %arg8[%c0_53, %c0_54, %c0_55], %91 {strides = array<i32>} : memref<1x128x128xf32, #tpu.memory_space<vmem>>, vector<1x128x128xf32>,
      %92 = tpu.iota {dimensions = array<i32: 1>} : vector<1x128xi32>
      %c0_i32_56 = arith.constant 0 : i32
      %93 = vector.broadcast %c0_i32_56 : i32 to vector<1x128xi32>
      %94 = arith.cmpi eq, %92, %93 : vector<1x128xi32>
      %c0_57 = arith.constant 0 : index
      %c0_58 = arith.constant 0 : index
      %95 = vector.load %arg9[%c0_57, %c0_58] : memref<1x1xf32, #tpu.memory_space<vmem>>, vector<1x1xf32>
      %c1_i32 = arith.constant 1 : i32
      %96 = vector.broadcast %c1_i32 : i32 to vector<1x128xi32>
      %97 = arith.cmpi eq, %92, %96 : vector<1x128xi32>
      %c0_59 = arith.constant 0 : index
      %c0_60 = arith.constant 0 : index
      %98 = vector.load %arg10[%c0_59, %c0_60] : memref<1x1xf32, #tpu.memory_space<vmem>>, vector<1x1xf32>
      %cst_61 = arith.constant 0.000000e+00 : f32
      %99 = vector.shape_cast %98 : vector<1x1xf32> to vector<1x1xf32>
      %100 = vector.broadcast %99 : vector<1x1xf32> to vector<1x128xf32>
      %101 = vector.broadcast %cst_61 : f32 to vector<1x128xf32>
      %102 = arith.select %97, %100, %101 : vector<1x128xi1>, vector<1x128xf32>
      %103 = vector.shape_cast %95 : vector<1x1xf32> to vector<1x1xf32>
      %104 = vector.broadcast %103 : vector<1x1xf32> to vector<1x128xf32>
      %105 = arith.select %94, %104, %102 : vector<1x128xi1>, vector<1x128xf32>
      %c0_62 = arith.constant 0 : index
      %c0_63 = arith.constant 0 : index
      %c0_64 = arith.constant 0 : index
      %106 = vector.load %arg7[%c0_62, %c0_63, %c0_64] : memref<1x1x128xf32, #tpu.memory_space<vmem>>, vector<1x1x128xf32>
      %107 = vector.shape_cast %106 : vector<1x1x128xf32> to vector<1x128xf32>
      %108 = vector.shape_cast %105 : vector<1x128xf32> to vector<1x1x128xf32>
      tpu.vector_store %arg7[%c0_62, %c0_63, %c0_64], %108 {strides = array<i32>} : memref<1x1x128xf32, #tpu.memory_space<vmem>>, vector<1x1x128xf32>,
    } else {
    }
    return
  }
  func.func @transform_0(%arg0: i32, %arg1: i32) -> (i32, i32, i32) {
    %c0_i32 = arith.constant 0 : i32
    %c0_i32_0 = arith.constant 0 : i32
    %c0_i32_1 = arith.constant 0 : i32
    return %arg0, %c0_i32, %c0_i32_0 : i32, i32, i32
  }
  func.func @transform_1(%arg0: i32, %arg1: i32) -> (i32, i32, i32) {
    %c0_i32 = arith.constant 0 : i32
    %c0_i32_0 = arith.constant 0 : i32
    %c0_i32_1 = arith.constant 0 : i32
    return %arg0, %c0_i32, %c0_i32_0 : i32, i32, i32
  }
  func.func @transform_2(%arg0: i32, %arg1: i32) -> (i32, i32) {
    %c0_i32 = arith.constant 0 : i32
    %c0_i32_0 = arith.constant 0 : i32
    return %arg1, %c0_i32 : i32, i32
  }
  func.func @transform_3(%arg0: i32, %arg1: i32) -> (i32, i32) {
    %c0_i32 = arith.constant 0 : i32
    %c0_i32_0 = arith.constant 0 : i32
    return %arg1, %c0_i32 : i32, i32
  }
  func.func @transform_4(%arg0: i32, %arg1: i32) -> (i32, i32, i32) {
    %c0_i32 = arith.constant 0 : i32
    %c0_i32_0 = arith.constant 0 : i32
    %c0_i32_1 = arith.constant 0 : i32
    return %arg0, %c0_i32, %c0_i32_0 : i32, i32, i32
  }
  func.func @transform_5(%arg0: i32, %arg1: i32) -> (i32, i32, i32) {
    %c0_i32 = arith.constant 0 : i32
    %c0_i32_0 = arith.constant 0 : i32
    %c0_i32_1 = arith.constant 0 : i32
    return %arg0, %c0_i32, %c0_i32_0 : i32, i32, i32
  }
  func.func @transform_6(%arg0: i32, %arg1: i32) -> (i32, i32, i32) {
    %c0_i32 = arith.constant 0 : i32
    %c0_i32_0 = arith.constant 0 : i32
    %c0_i32_1 = arith.constant 0 : i32
    return %arg0, %c0_i32, %c0_i32_0 : i32, i32, i32
  }
}

</mosaic_0001>

<llo_original>
// kernel: tpu_custom_call.1
$region0: #{tpu_custom_call.1}
  #allocation0 [shape = 'u32[]', space=smem, size = 0x4, offset = 0x4, fixed_abs, tag = 'smem constant byte address 0x4 - core index']
  #allocation1 [shape = 'u32[72,128]{1,0:T(1,128)}', space=vmem, size = 0x9000, scoped, tag = 'internal scratch']
  #allocation2 [shape = 'f32[1,1]{1,0:T(1,128)}', space=vmem, size = 0x200, scoped, tag = 'scratch operand']
  #allocation3 [shape = 'f32[1,1]{1,0:T(1,128)}', space=vmem, size = 0x200, scoped, tag = 'scratch operand']
  %s0 = inlined_call_operand.hbm [shape: f32[2,1,128], index: 0, kind: input, shape index: {}]
  %s1 = inlined_call_operand.hbm [shape: f32[2,128,128], index: 1, kind: input, shape index: {}]
  %s2 = inlined_call_operand.hbm [shape: f32[128,128], index: 2, kind: input, shape index: {}]
  %s3 = inlined_call_operand.hbm [shape: f32[128,128], index: 3, kind: input, shape index: {}]
  %s4 = inlined_call_operand.hbm [shape: f32[2,1,128], index: 4, kind: output, shape index: {0}]
  %s5 = inlined_call_operand.hbm [shape: f32[2,1,128], index: 5, kind: output, shape index: {1}]
  %s6 = inlined_call_operand.hbm [shape: f32[2,128,128], index: 6, kind: output, shape index: {2}]
  %7 = xla_tuple %s4, %s5, %s6
  %s8 = sld [smem:[#allocation0]]
  $region89: #{tpu_custom_call.1} parent=0
    _
  %s10 = ssub.s32 1, %s8
  %s11 = scalar_select 0, %s10, %s8
  $region1: #{tpu_custom_call.1} parent=0
    #allocation4 [shape = 'u8[1024]{0}', space=vmem, size = 0x400, scoped, tag = 'input window, operand 0']
    #allocation5 [shape = 's32[2]{0}', space=sflag, size = 0x8, scoped, tag = 'scoped memory for tpu_custom_call.1']
    #allocation6 [shape = 's32[2]{0}', space=sflag, size = 0x8, scoped, tag = 'scoped memory for tpu_custom_call.1']
    #allocation7 [shape = 'u8[131072]{0}', space=vmem, size = 0x20000, scoped, tag = 'input window, operand 1']
    #allocation8 [shape = 's32[2]{0}', space=sflag, size = 0x8, scoped, tag = 'scoped memory for tpu_custom_call.1']
    #allocation9 [shape = 'u8[65536]{0}', space=vmem, size = 0x10000, scoped, tag = 'input window, operand 2, single buffered']
    #allocation10 [shape = 'u8[65536]{0}', space=vmem, size = 0x10000, scoped, tag = 'input window, operand 3, single buffered']
    #allocation11 [shape = 's32[1]{0}', space=sflag, size = 0x4, scoped, tag = 'scoped memory for tpu_custom_call.1']
    #allocation12 [shape = 'u8[1024]{0}', space=vmem, size = 0x400, scoped, tag = 'output window, operand 0']
    #allocation13 [shape = 'u8[1024]{0}', space=vmem, size = 0x400, scoped, tag = 'output window, operand 1']
    #allocation14 [shape = 's32[2]{0}', space=sflag, size = 0x8, scoped, tag = 'scoped memory for tpu_custom_call.1']
    #allocation15 [shape = 'u8[131072]{0}', space=vmem, size = 0x20000, scoped, tag = 'output window, operand 2']
    %12 = vsyncpa [#allocation5], 0
    %s13 = scalar_lea.sflag [#allocation5], 1
    %14 = vsyncpa %s13, 0
    %15 = vsyncpa [#allocation8], 0
    %s16 = scalar_lea.sflag [#allocation8], 1
    %17 = vsyncpa %s16, 0
    %18 = vsyncpa [#allocation11], 0
    %19 = vsyncpa [#allocation6], 0
    %s20 = scalar_lea.sflag [#allocation6], 1
    %21 = vsyncpa %s20, 0
    %22 = vsyncpa [#allocation14], 0
    %s23 = scalar_lea.sflag [#allocation14], 1
    %24 = vsyncpa %s23, 0
    loop: start=0, step=1, limit=4
    $region2: #{tpu_custom_call.1} parent=1 // loop_pre_header
      _
    $region3: #{tpu_custom_call.1} parent=1 // loop_header
      %s26 = sphi 0, %s30
      %p27 = scmp.ge.s32.totalorder %s26, 4
      %s33 = sphi 0, %s45
      %s34 = sphi 0, %s41
      %s35 = sphi 0, %s33
      %s36 = sphi 0, %s34
      %s37 = sphi 0, %s35
      %s38 = sphi 0, %s36
      %s48 = sphi 0, %s50
      %s51 = sphi 0, %s48
      %s52 = sphi 0, %s51
      %s68 = sphi 0, %s52
      %s74 = sphi 0, %s76
      %s77 = sphi 0, %s74
      %s78 = sphi 0, %s77
      %s94 = sphi 0, %s78
      %s100 = sphi 0, %s102
      %s103 = sphi 0, %s100
      %s104 = sphi 0, %s103
      %s120 = sphi 0, %s104
      %s126 = sphi 0, %s128
      %s129 = sphi 0, %s126
      %s130 = sphi 0, %s129
      %s146 = sphi 0, %s130
      %s152 = sphi 0, %s154
      %s155 = sphi 0, %s152
      %s156 = sphi 0, %s155
      %s172 = sphi 0, %s156
      %s178 = sphi 0, %s180
      %s181 = sphi 0, %s178
      %s182 = sphi 0, %s181
      %s198 = sphi 0, %s182
      %s204 = sphi 0, %s206
      %s207 = sphi 0, %s204
      %s208 = sphi 0, %s207
      %s224 = sphi 0, %s208
    $region4: #{tpu_custom_call.1} parent=1 // loop_header_branch
      %29 = sbr.rel (%p27) target = $region8
    $region5: #{tpu_custom_call.1} parent=1 // loop_body
      %s31 = ssub.s32 %s26, 1
      %s32 = ssub.s32 %s26, 2
      %s39 = sadd.s32 1, %s34
      %p40 = scmp.ge.s32.totalorder %s39, 1
      %s41 = scalar_select %p40, 0, %s39
      %s42 = sadd.s32 1, %s33
      %s43 = scalar_select %p40, %s42, %s33
      %p44 = scmp.ge.s32.totalorder %s43, 2
      %s45 = scalar_select %p44, 0, %s43
      %s46 = ssub.s32 %s33, %s45
      %p47 = scmp.eq.s32.totalorder %s46, 0
      %s49 = sadd.s32 %s48, 1
      %s50 = scalar_select %p47, %s48, %s49
      %p53 = pneg %p47
      %p54 = scmp.eq.s32.totalorder %s26, 1
      %p55 = por %p53, %p54
      %p56 = scmp.ne.s32.totalorder %s48, %s51
      %p57 = scmp.eq.s32.totalorder %s26, 0
      %p58 = por %p56, %p57
      %p59 = scmp.ne.s32.totalorder %s48, %s51
      %p60 = scmp.eq.s32.totalorder %s31, 1
      %p61 = por %p59, %p60
      %p62 = scmp.ne.s32.totalorder %s51, %s52
      %p63 = scmp.eq.s32.totalorder %s31, 0
      %p64 = por %p62, %p63
      %p65 = scmp.ne.s32.totalorder %s51, %s52
      %p66 = scmp.eq.s32.totalorder %s32, 1
      %p67 = por %p65, %p66
      %p69 = scmp.ne.s32.totalorder %s52, %s68
      %p70 = scmp.eq.s32.totalorder %s32, 0
      %p71 = por %p69, %p70
      %s72 = ssub.s32 %s33, %s45
      %p73 = scmp.eq.s32.totalorder %s72, 0
      %s75 = sadd.s32 %s74, 1
      %s76 = scalar_select %p73, %s74, %s75
      %p79 = pneg %p73
      %p80 = scmp.eq.s32.totalorder %s26, 1
      %p81 = por %p79, %p80
      %p82 = scmp.ne.s32.totalorder %s74, %s77
      %p83 = scmp.eq.s32.totalorder %s26, 0
      %p84 = por %p82, %p83
      %p85 = scmp.ne.s32.totalorder %s74, %s77
      %p86 = scmp.eq.s32.totalorder %s31, 1
      %p87 = por %p85, %p86
      %p88 = scmp.ne.s32.totalorder %s77, %s78
      %p89 = scmp.eq.s32.totalorder %s31, 0
      %p90 = por %p88, %p89
      %p91 = scmp.ne.s32.totalorder %s77, %s78
      %p92 = scmp.eq.s32.totalorder %s32, 1
      %p93 = por %p91, %p92
      %p95 = scmp.ne.s32.totalorder %s78, %s94
      %p96 = scmp.eq.s32.totalorder %s32, 0
      %p97 = por %p95, %p96
      %s98 = ssub.s32 %s34, %s41
      %p99 = scmp.eq.s32.totalorder %s98, 0
      %s101 = sadd.s32 %s100, 1
      %s102 = scalar_select %p99, %s100, %s101
      %p105 = pneg %p99
      %p106 = scmp.eq.s32.totalorder %s26, 1
      %p107 = por %p105, %p106
      %p108 = scmp.ne.s32.totalorder %s100, %s103
      %p109 = scmp.eq.s32.totalorder %s26, 0
      %p110 = por %p108, %p109
      %p111 = scmp.ne.s32.totalorder %s100, %s103
      %p112 = scmp.eq.s32.totalorder %s31, 1
      %p113 = por %p111, %p112
      %p114 = scmp.ne.s32.totalorder %s103, %s104
      %p115 = scmp.eq.s32.totalorder %s31, 0
      %p116 = por %p114, %p115
      %p117 = scmp.ne.s32.totalorder %s103, %s104
      %p118 = scmp.eq.s32.totalorder %s32, 1
      %p119 = por %p117, %p118
      %p121 = scmp.ne.s32.totalorder %s104, %s120
      %p122 = scmp.eq.s32.totalorder %s32, 0
      %p123 = por %p121, %p122
      %s124 = ssub.s32 %s34, %s41
      %p125 = scmp.eq.s32.totalorder %s124, 0
      %s127 = sadd.s32 %s126, 1
      %s128 = scalar_select %p125, %s126, %s127
      %p131 = pneg %p125
      %p132 = scmp.eq.s32.totalorder %s26, 1
      %p133 = por %p131, %p132
      %p134 = scmp.ne.s32.totalorder %s126, %s129
      %p135 = scmp.eq.s32.totalorder %s26, 0
      %p136 = por %p134, %p135
      %p137 = scmp.ne.s32.totalorder %s126, %s129
      %p138 = scmp.eq.s32.totalorder %s31, 1
      %p139 = por %p137, %p138
      %p140 = scmp.ne.s32.totalorder %s129, %s130
      %p141 = scmp.eq.s32.totalorder %s31, 0
      %p142 = por %p140, %p141
      %p143 = scmp.ne.s32.totalorder %s129, %s130
      %p144 = scmp.eq.s32.totalorder %s32, 1
      %p145 = por %p143, %p144
      %p147 = scmp.ne.s32.totalorder %s130, %s146
      %p148 = scmp.eq.s32.totalorder %s32, 0
      %p149 = por %p147, %p148
      %s150 = ssub.s32 %s33, %s45
      %p151 = scmp.eq.s32.totalorder %s150, 0
      %s153 = sadd.s32 %s152, 1
      %s154 = scalar_select %p151, %s152, %s153
      %p157 = pneg %p151
      %p158 = scmp.eq.s32.totalorder %s26, 1
      %p159 = por %p157, %p158
      %p160 = scmp.ne.s32.totalorder %s152, %s155
      %p161 = scmp.eq.s32.totalorder %s26, 0
      %p162 = por %p160, %p161
      %p163 = scmp.ne.s32.totalorder %s152, %s155
      %p164 = scmp.eq.s32.totalorder %s31, 1
      %p165 = por %p163, %p164
      %p166 = scmp.ne.s32.totalorder %s155, %s156
      %p167 = scmp.eq.s32.totalorder %s31, 0
      %p168 = por %p166, %p167
      %p169 = scmp.ne.s32.totalorder %s155, %s156
      %p170 = scmp.eq.s32.totalorder %s32, 1
      %p171 = por %p169, %p170
      %p173 = scmp.ne.s32.totalorder %s156, %s172
      %p174 = scmp.eq.s32.totalorder %s32, 0
      %p175 = por %p173, %p174
      %s176 = ssub.s32 %s33, %s45
      %p177 = scmp.eq.s32.totalorder %s176, 0
      %s179 = sadd.s32 %s178, 1
      %s180 = scalar_select %p177, %s178, %s179
      %p183 = pneg %p177
      %p184 = scmp.eq.s32.totalorder %s26, 1
      %p185 = por %p183, %p184
      %p186 = scmp.ne.s32.totalorder %s178, %s181
      %p187 = scmp.eq.s32.totalorder %s26, 0
      %p188 = por %p186, %p187
      %p189 = scmp.ne.s32.totalorder %s178, %s181
      %p190 = scmp.eq.s32.totalorder %s31, 1
      %p191 = por %p189, %p190
      %p192 = scmp.ne.s32.totalorder %s181, %s182
      %p193 = scmp.eq.s32.totalorder %s31, 0
      %p194 = por %p192, %p193
      %p195 = scmp.ne.s32.totalorder %s181, %s182
      %p196 = scmp.eq.s32.totalorder %s32, 1
      %p197 = por %p195, %p196
      %p199 = scmp.ne.s32.totalorder %s182, %s198
      %p200 = scmp.eq.s32.totalorder %s32, 0
      %p201 = por %p199, %p200
      %s202 = ssub.s32 %s33, %s45
      %p203 = scmp.eq.s32.totalorder %s202, 0
      %s205 = sadd.s32 %s204, 1
      %s206 = scalar_select %p203, %s204, %s205
      %p209 = pneg %p203
      %p210 = scmp.eq.s32.totalorder %s26, 1
      %p211 = por %p209, %p210
      %p212 = scmp.ne.s32.totalorder %s204, %s207
      %p213 = scmp.eq.s32.totalorder %s26, 0
      %p214 = por %p212, %p213
      %p215 = scmp.ne.s32.totalorder %s204, %s207
      %p216 = scmp.eq.s32.totalorder %s31, 1
      %p217 = por %p215, %p216
      %p218 = scmp.ne.s32.totalorder %s207, %s208
      %p219 = scmp.eq.s32.totalorder %s31, 0
      %p220 = por %p218, %p219
      %p221 = scmp.ne.s32.totalorder %s207, %s208
      %p222 = scmp.eq.s32.totalorder %s32, 1
      %p223 = por %p221, %p222
      %p225 = scmp.ne.s32.totalorder %s208, %s224
      %p226 = scmp.eq.s32.totalorder %s32, 0
      %p227 = por %p225, %p226
      %p228 = scmp.le.s32.totalorder 1, %s26
      %p229 = scmp.lt.s32.totalorder %s26, 3
      %p230 = pnand %p228, %p229
      %p231 = pneg %p230
      // Predicated region
      $region9: #{tpu_custom_call.1} parent=5 // pred_check
        _
      $region10: #{tpu_custom_call.1} parent=5 // pred_check_branch
        %233 = sbr.rel (%p230) target = $region12
      $region11: #{tpu_custom_call.1} parent=5 // pred_region
        %s234 = ssub.s32 %s26, 1
        // Predicated region
        $region13: #{tpu_custom_call.1} parent=11 // pred_check
          %p235 = pneg %p116
        $region14: #{tpu_custom_call.1} parent=11 // pred_check_branch
          %237 = sbr.rel (%p235) target = $region16
        $region15: #{tpu_custom_call.1} parent=11 // pred_region
          %s238 = smul.u32 16, %s36
          %240 = vsyncadd [#allocation8], 0
          %s241 = smul.addr %s238, 8
          %s242 = scalar_lea.hbm %s2, %s241
          %s243 = sshll.u32 %s242, 4
          %s244 = int_to_ptr.hbm [resolvable:$true] %s243
          %s245 = sshll.u32 [#allocation9], 4
          %s246 = int_to_ptr.vmem [resolvable:$true] %s245
          %251 = dma.hbm_to_vmem [thread:$0]  %s244, 2048, %s246, [#allocation8], 128, 128, 8
        $region16: #{tpu_custom_call.1} parent=11 // pred_fallthru
          _
        // Predicated region
        $region17: #{tpu_custom_call.1} parent=11 // pred_check
          %p252 = pneg %p142
        $region18: #{tpu_custom_call.1} parent=11 // pred_check_branch
          %254 = sbr.rel (%p252) target = $region20
        $region19: #{tpu_custom_call.1} parent=11 // pred_region
          %s255 = smul.u32 16, %s36
          %257 = vsyncadd [#allocation11], 0
          %s258 = smul.addr %s255, 8
          %s259 = scalar_lea.hbm %s3, %s258
          %s260 = sshll.u32 %s259, 4
          %s261 = int_to_ptr.hbm [resolvable:$true] %s260
          %s262 = sshll.u32 [#allocation10], 4
          %s263 = int_to_ptr.vmem [resolvable:$true] %s262
          %268 = dma.hbm_to_vmem [thread:$0]  %s261, 2048, %s263, [#allocation11], 128, 128, 8
        $region20: #{tpu_custom_call.1} parent=11 // pred_fallthru
          _
      $region12: #{tpu_custom_call.1} parent=5 // pred_fallthru
        _
      %p269 = scmp.lt.s32.totalorder %s26, 2
      // Predicated region
      $region21: #{tpu_custom_call.1} parent=5 // pred_check
        %p270 = pneg %p269
      $region22: #{tpu_custom_call.1} parent=5 // pred_check_branch
        %272 = sbr.rel (%p270) target = $region24
      $region23: #{tpu_custom_call.1} parent=5 // pred_region
        // Predicated region
        $region25: #{tpu_custom_call.1} parent=23 // pred_check
          %p273 = pneg %p58
        $region26: #{tpu_custom_call.1} parent=23 // pred_check_branch
          %275 = sbr.rel (%p273) target = $region28
        $region27: #{tpu_custom_call.1} parent=23 // pred_region
          %s276 = sand.u32 %s48, 1
          %s277 = scalar_lea.sflag [#allocation5], %s276
          %s278 = sand.u32 %s48, 1
          %s279 = scalar_lea.vmem [#allocation4], %s278
          %281 = vsyncadd %s277, 0
          %s282 = scalar_lea.hbm %s0, %s33
          %s284 = sshll.u32 %s282, 4
          %s285 = int_to_ptr.hbm [resolvable:$true] %s284
          %s286 = sshll.u32 %s279, 4
          %s287 = int_to_ptr.vmem [resolvable:$true] %s286
          %289 = dma.hbm_to_vmem [thread:$0]  %s285, 16, %s287, %s277
        $region28: #{tpu_custom_call.1} parent=23 // pred_fallthru
          _
        // Predicated region
        $region29: #{tpu_custom_call.1} parent=23 // pred_check
          %p290 = pneg %p84
        $region30: #{tpu_custom_call.1} parent=23 // pred_check_branch
          %292 = sbr.rel (%p290) target = $region32
        $region31: #{tpu_custom_call.1} parent=23 // pred_region
          %s293 = sand.u32 %s26, 1
          %s294 = scalar_lea.sflag [#allocation8], %s293
          %s295 = sand.u32 %s74, 1
          %s296 = smul.addr %s295, 128
          %s297 = scalar_lea.vmem [#allocation7], %s296
          %299 = vsyncadd %s294, 0
          %s300 = smul.addr %s33, 16
          %s301 = smul.addr %s300, 8
          %s302 = scalar_lea.hbm %s1, %s301
          %s303 = sshll.u32 %s302, 4
          %s304 = int_to_ptr.hbm [resolvable:$true] %s303
          %s305 = sshll.u32 %s297, 4
          %s306 = int_to_ptr.vmem [resolvable:$true] %s305
          %311 = dma.hbm_to_vmem [thread:$0]  %s304, 2048, %s306, %s294, 128, 128, 8
        $region32: #{tpu_custom_call.1} parent=23 // pred_fallthru
          _
      $region24: #{tpu_custom_call.1} parent=5 // pred_fallthru
        _
      %p312 = scmp.le.s32.totalorder 1, %s26
      %p313 = scmp.lt.s32.totalorder %s26, 3
      %p314 = pnand %p312, %p313
      %p315 = pneg %p314
      // Predicated region
      $region33: #{tpu_custom_call.1} parent=5 // pred_check
        _
      $region34: #{tpu_custom_call.1} parent=5 // pred_check_branch
        %317 = sbr.rel (%p314) target = $region36
      $region35: #{tpu_custom_call.1} parent=5 // pred_region
        %s318 = ssub.s32 %s26, 1
        %s319 = sand.u32 %s51, 1
        %s320 = scalar_lea.sflag [#allocation5], %s319
        %s321 = sand.u32 %s51, 1
        %s322 = scalar_lea.vmem [#allocation4], %s321
        // Predicated region
        $region37: #{tpu_custom_call.1} parent=35 // pred_check
          %p323 = pneg %p64
        $region38: #{tpu_custom_call.1} parent=35 // pred_check_branch
          %325 = sbr.rel (%p323) target = $region40
        $region39: #{tpu_custom_call.1} parent=35 // pred_region
          %327 = dma.done %s320, 16
        $region40: #{tpu_custom_call.1} parent=35 // pred_fallthru
          _
        %s328 = sand.u32 %s31, 1
        %s329 = scalar_lea.sflag [#allocation8], %s328
        %s330 = sand.u32 %s77, 1
        %s331 = smul.addr %s330, 128
        %s332 = scalar_lea.vmem [#allocation7], %s331
        // Predicated region
        $region41: #{tpu_custom_call.1} parent=35 // pred_check
          %p333 = pneg %p90
        $region42: #{tpu_custom_call.1} parent=35 // pred_check_branch
          %335 = sbr.rel (%p333) target = $region44
        $region43: #{tpu_custom_call.1} parent=35 // pred_region
          %337 = dma.done %s329, 2048
        $region44: #{tpu_custom_call.1} parent=35 // pred_fallthru
          _
        // Predicated region
        $region45: #{tpu_custom_call.1} parent=35 // pred_check
          %p338 = pneg %p116
        $region46: #{tpu_custom_call.1} parent=35 // pred_check_branch
          %340 = sbr.rel (%p338) target = $region48
        $region47: #{tpu_custom_call.1} parent=35 // pred_region
          %342 = dma.done [#allocation8], 2048
        $region48: #{tpu_custom_call.1} parent=35 // pred_fallthru
          _
        // Predicated region
        $region49: #{tpu_custom_call.1} parent=35 // pred_check
          %p343 = pneg %p142
        $region50: #{tpu_custom_call.1} parent=35 // pred_check_branch
          %345 = sbr.rel (%p343) target = $region52
        $region51: #{tpu_custom_call.1} parent=35 // pred_region
          %347 = dma.done [#allocation11], 2048
        $region52: #{tpu_custom_call.1} parent=35 // pred_fallthru
          _
        %s348 = sand.u32 %s51, 1
        %s349 = scalar_lea.sflag [#allocation5], %s348
        %s350 = sand.u32 %s51, 1
        %s351 = scalar_lea.vmem [#allocation4], %s350
        %p352 = pneg %p64
        %p353 = pneg %p61
        %s354 = sand.u32 %s31, 1
        %s355 = scalar_lea.sflag [#allocation8], %s354
        %s356 = sand.u32 %s77, 1
        %s357 = smul.addr %s356, 128
        %s358 = scalar_lea.vmem [#allocation7], %s357
        %p359 = pneg %p90
        %p360 = pneg %p87
        %p361 = pneg %p116
        %p362 = pneg %p113
        %p363 = pneg %p142
        %p364 = pneg %p139
        %p365 = pneg %p168
        %p366 = pneg %p165
        %s367 = sand.u32 %s155, 1
        %s368 = scalar_lea.sflag [#allocation6], %s367
        %s369 = sand.u32 %s155, 1
        %s370 = scalar_lea.vmem [#allocation12], %s369
        %p371 = pneg %p194
        %p372 = pneg %p191
        %s373 = sand.u32 %s31, 1
        %s374 = scalar_lea.sflag [#allocation14], %s373
        %s375 = sand.u32 %s181, 1
        %s376 = scalar_lea.vmem [#allocation13], %s375
        %p377 = pneg %p220
        %p378 = pneg %p217
        %s379 = sand.u32 %s31, 1
        %s380 = scalar_lea.sflag [#allocation14], %s379
        %s381 = sand.u32 %s207, 1
        %s382 = smul.addr %s381, 128
        %s383 = scalar_lea.vmem [#allocation15], %s382
        %s384 = smul.u32 16, %s36
        %s385 = smul.u32 16, %s36
        %p386 = scmp.eq.s32.totalorder %s36, 0
        // Predicated region
        $region53: #{tpu_custom_call.1} parent=35 // pred_check
          %p387 = pneg %p386
        $region54: #{tpu_custom_call.1} parent=35 // pred_check_branch
          %389 = sbr.rel (%p387) target = $region56
        $region55: #{tpu_custom_call.1} parent=35 // pred_region
          %390 = vst [vmem:[%s370] sm:$0x1] 0.0
          %391 = vst [vmem:[%s383] sm:$0xff] 0.0
          %392 = vst [vmem:[%s383 + $0x8] sm:$0xff] 0.0
          %393 = vst [vmem:[%s383 + $0x10] sm:$0xff] 0.0
          %394 = vst [vmem:[%s383 + $0x18] sm:$0xff] 0.0
          %395 = vst [vmem:[%s383 + $0x20] sm:$0xff] 0.0
          %396 = vst [vmem:[%s383 + $0x28] sm:$0xff] 0.0
          %397 = vst [vmem:[%s383 + $0x30] sm:$0xff] 0.0
          %398 = vst [vmem:[%s383 + $0x38] sm:$0xff] 0.0
          %399 = vst [vmem:[%s383 + $0x40] sm:$0xff] 0.0
          %400 = vst [vmem:[%s383 + $0x48] sm:$0xff] 0.0
          %401 = vst [vmem:[%s383 + $0x50] sm:$0xff] 0.0
          %402 = vst [vmem:[%s383 + $0x58] sm:$0xff] 0.0
          %403 = vst [vmem:[%s383 + $0x60] sm:$0xff] 0.0
          %404 = vst [vmem:[%s383 + $0x68] sm:$0xff] 0.0
          %405 = vst [vmem:[%s383 + $0x70] sm:$0xff] 0.0
          %406 = vst [vmem:[%s383 + $0x78] sm:$0xff] 0.0
          %vm407 = vcmask 0
          %408 = vst.msk [vmem:[#allocation2] sm:$0x1] %vm407, 0.0
          %409 = vst.msk [vmem:[#allocation3] sm:$0x1] %vm407, 0.0
        $region56: #{tpu_custom_call.1} parent=35 // pred_fallthru
          _
        %v410 = vld [vmem:[%s322] sm:$0x1]
        %v411 = vld [vmem:[%s332] sm:$0xff]
        %v412 = vld [vmem:[%s332 + $0x8] sm:$0xff]
        %v413 = vld [vmem:[%s332 + $0x10] sm:$0xff]
        %v414 = vld [vmem:[%s332 + $0x18] sm:$0xff]
        %v415 = vld [vmem:[%s332 + $0x20] sm:$0xff]
        %v416 = vld [vmem:[%s332 + $0x28] sm:$0xff]
        %v417 = vld [vmem:[%s332 + $0x30] sm:$0xff]
        %v418 = vld [vmem:[%s332 + $0x38] sm:$0xff]
        %v419 = vld [vmem:[%s332 + $0x40] sm:$0xff]
        %v420 = vld [vmem:[%s332 + $0x48] sm:$0xff]
        %v421 = vld [vmem:[%s332 + $0x50] sm:$0xff]
        %v422 = vld [vmem:[%s332 + $0x58] sm:$0xff]
        %v423 = vld [vmem:[%s332 + $0x60] sm:$0xff]
        %v424 = vld [vmem:[%s332 + $0x68] sm:$0xff]
        %v425 = vld [vmem:[%s332 + $0x70] sm:$0xff]
        %v426 = vld [vmem:[%s332 + $0x78] sm:$0xff]
        %v427 = vld [vmem:[#allocation9] sm:$0xff]
        %v428 = vld [vmem:[#allocation9 + $0x8] sm:$0xff]
        %v429 = vld [vmem:[#allocation9 + $0x10] sm:$0xff]
        %v430 = vld [vmem:[#allocation9 + $0x18] sm:$0xff]
        %v431 = vld [vmem:[#allocation9 + $0x20] sm:$0xff]
        %v432 = vld [vmem:[#allocation9 + $0x28] sm:$0xff]
        %v433 = vld [vmem:[#allocation9 + $0x30] sm:$0xff]
        %v434 = vld [vmem:[#allocation9 + $0x38] sm:$0xff]
        %v435 = vld [vmem:[#allocation9 + $0x40] sm:$0xff]
        %v436 = vld [vmem:[#allocation9 + $0x48] sm:$0xff]
        %v437 = vld [vmem:[#allocation9 + $0x50] sm:$0xff]
        %v438 = vld [vmem:[#allocation9 + $0x58] sm:$0xff]
        %v439 = vld [vmem:[#allocation9 + $0x60] sm:$0xff]
        %v440 = vld [vmem:[#allocation9 + $0x68] sm:$0xff]
        %v441 = vld [vmem:[#allocation9 + $0x70] sm:$0xff]
        %v442 = vld [vmem:[#allocation9 + $0x78] sm:$0xff]
        %v443 = vld [vmem:[#allocation10] sm:$0xff]
        %v444 = vld [vmem:[#allocation10 + $0x8] sm:$0xff]
        %v445 = vld [vmem:[#allocation10 + $0x10] sm:$0xff]
        %v446 = vld [vmem:[#allocation10 + $0x18] sm:$0xff]
        %v447 = vld [vmem:[#allocation10 + $0x20] sm:$0xff]
        %v448 = vld [vmem:[#allocation10 + $0x28] sm:$0xff]
        %v449 = vld [vmem:[#allocation10 + $0x30] sm:$0xff]
        %v450 = vld [vmem:[#allocation10 + $0x38] sm:$0xff]
        %v451 = vld [vmem:[#allocation10 + $0x40] sm:$0xff]
        %v452 = vld [vmem:[#allocation10 + $0x48] sm:$0xff]
        %v453 = vld [vmem:[#allocation10 + $0x50] sm:$0xff]
        %v454 = vld [vmem:[#allocation10 + $0x58] sm:$0xff]
        %v455 = vld [vmem:[#allocation10 + $0x60] sm:$0xff]
        %v456 = vld [vmem:[#allocation10 + $0x68] sm:$0xff]
        %v457 = vld [vmem:[#allocation10 + $0x70] sm:$0xff]
        %v458 = vld [vmem:[#allocation10 + $0x78] sm:$0xff]
        %v460 = vperm.slane %v410, 0
        %v462 = vsub.f32 %v460, %v427
        %v463 = vsub.f32 %v460, %v428
        %v464 = vsub.f32 %v460, %v429
        %v465 = vsub.f32 %v460, %v430
        %v466 = vsub.f32 %v460, %v431
        %v467 = vsub.f32 %v460, %v432
        %v468 = vsub.f32 %v460, %v433
        %v469 = vsub.f32 %v460, %v434
        %v470 = vsub.f32 %v460, %v435
        %v471 = vsub.f32 %v460, %v436
        %v472 = vsub.f32 %v460, %v437
        %v473 = vsub.f32 %v460, %v438
        %v474 = vsub.f32 %v460, %v439
        %v475 = vsub.f32 %v460, %v440
        %v476 = vsub.f32 %v460, %v441
        %v477 = vsub.f32 %v460, %v442
        %v478 = vmul.f32 %v462, %v462
        %v479 = vmul.f32 %v463, %v463
        %v480 = vmul.f32 %v464, %v464
        %v481 = vmul.f32 %v465, %v465
        %v482 = vmul.f32 %v466, %v466
        %v483 = vmul.f32 %v467, %v467
        %v484 = vmul.f32 %v468, %v468
        %v485 = vmul.f32 %v469, %v469
        %v486 = vmul.f32 %v470, %v470
        %v487 = vmul.f32 %v471, %v471
        %v488 = vmul.f32 %v472, %v472
        %v489 = vmul.f32 %v473, %v473
        %v490 = vmul.f32 %v474, %v474
        %v491 = vmul.f32 %v475, %v475
        %v492 = vmul.f32 %v476, %v476
        %v493 = vmul.f32 %v477, %v477
        %494 = vadd.xlane.f32.xlu0 %v478
        %v495 = vpop.xlane.xlu0 %494
        %496 = vadd.xlane.f32.xlu0 %v479
        %v497 = vpop.xlane.xlu0 %496
        %498 = vadd.xlane.f32.xlu0 %v480
        %v499 = vpop.xlane.xlu0 %498
        %500 = vadd.xlane.f32.xlu0 %v481
        %v501 = vpop.xlane.xlu0 %500
        %502 = vadd.xlane.f32.xlu0 %v482
        %v503 = vpop.xlane.xlu0 %502
        %504 = vadd.xlane.f32.xlu0 %v483
        %v505 = vpop.xlane.xlu0 %504
        %506 = vadd.xlane.f32.xlu0 %v484
        %v507 = vpop.xlane.xlu0 %506
        %508 = vadd.xlane.f32.xlu0 %v485
        %v509 = vpop.xlane.xlu0 %508
        %510 = vadd.xlane.f32.xlu0 %v486
        %v511 = vpop.xlane.xlu0 %510
        %512 = vadd.xlane.f32.xlu0 %v487
        %v513 = vpop.xlane.xlu0 %512
        %514 = vadd.xlane.f32.xlu0 %v488
        %v515 = vpop.xlane.xlu0 %514
        %516 = vadd.xlane.f32.xlu0 %v489
        %v517 = vpop.xlane.xlu0 %516
        %518 = vadd.xlane.f32.xlu0 %v490
        %v519 = vpop.xlane.xlu0 %518
        %520 = vadd.xlane.f32.xlu0 %v491
        %v521 = vpop.xlane.xlu0 %520
        %522 = vadd.xlane.f32.xlu0 %v492
        %v523 = vpop.xlane.xlu0 %522
        %524 = vadd.xlane.f32.xlu0 %v493
        %v525 = vpop.xlane.xlu0 %524
        %v526 = vadd.f32 %v495, 1e-30
        %v527 = vadd.f32 %v497, 1e-30
        %v528 = vadd.f32 %v499, 1e-30
        %v529 = vadd.f32 %v501, 1e-30
        %v530 = vadd.f32 %v503, 1e-30
        %v531 = vadd.f32 %v505, 1e-30
        %v532 = vadd.f32 %v507, 1e-30
        %v533 = vadd.f32 %v509, 1e-30
        %v534 = vadd.f32 %v511, 1e-30
        %v535 = vadd.f32 %v513, 1e-30
        %v536 = vadd.f32 %v515, 1e-30
        %v537 = vadd.f32 %v517, 1e-30
        %v538 = vadd.f32 %v519, 1e-30
        %v539 = vadd.f32 %v521, 1e-30
        %v540 = vadd.f32 %v523, 1e-30
        %v541 = vadd.f32 %v525, 1e-30
        %v542 = vrsqrt.pop %v526
        %v543 = vmul.f32 %v542, %v526
        %v544 = vmul.f32 %v543, %v542
        %v545 = vmul.f32 0.5, %v544
        %v546 = vsub.f32 1.5, %v545
        %v547 = vmul.f32 %v542, %v546
        %vm548 = vweird.f32 %v526
        %vm549 = vweird.f32 %v542
        %vm550 = vmor %vm548, %vm549
        %v551 = vsel %vm550, %v542, %v547
        %v552 = vrsqrt.pop %v527
        %v553 = vmul.f32 %v552, %v527
        %v554 = vmul.f32 %v553, %v552
        %v555 = vmul.f32 0.5, %v554
        %v556 = vsub.f32 1.5, %v555
        %v557 = vmul.f32 %v552, %v556
        %vm558 = vweird.f32 %v527
        %vm559 = vweird.f32 %v552
        %vm560 = vmor %vm558, %vm559
        %v561 = vsel %vm560, %v552, %v557
        %v562 = vrsqrt.pop %v528
        %v563 = vmul.f32 %v562, %v528
        %v564 = vmul.f32 %v563, %v562
        %v565 = vmul.f32 0.5, %v564
        %v566 = vsub.f32 1.5, %v565
        %v567 = vmul.f32 %v562, %v566
        %vm568 = vweird.f32 %v528
        %vm569 = vweird.f32 %v562
        %vm570 = vmor %vm568, %vm569
        %v571 = vsel %vm570, %v562, %v567
        %v572 = vrsqrt.pop %v529
        %v573 = vmul.f32 %v572, %v529
        %v574 = vmul.f32 %v573, %v572
        %v575 = vmul.f32 0.5, %v574
        %v576 = vsub.f32 1.5, %v575
        %v577 = vmul.f32 %v572, %v576
        %vm578 = vweird.f32 %v529
        %vm579 = vweird.f32 %v572
        %vm580 = vmor %vm578, %vm579
        %v581 = vsel %vm580, %v572, %v577
        %v582 = vrsqrt.pop %v530
        %v583 = vmul.f32 %v582, %v530
        %v584 = vmul.f32 %v583, %v582
        %v585 = vmul.f32 0.5, %v584
        %v586 = vsub.f32 1.5, %v585
        %v587 = vmul.f32 %v582, %v586
        %vm588 = vweird.f32 %v530
        %vm589 = vweird.f32 %v582
        %vm590 = vmor %vm588, %vm589
        %v591 = vsel %vm590, %v582, %v587
        %v592 = vrsqrt.pop %v531
        %v593 = vmul.f32 %v592, %v531
        %v594 = vmul.f32 %v593, %v592
        %v595 = vmul.f32 0.5, %v594
        %v596 = vsub.f32 1.5, %v595
        %v597 = vmul.f32 %v592, %v596
        %vm598 = vweird.f32 %v531
        %vm599 = vweird.f32 %v592
        %vm600 = vmor %vm598, %vm599
        %v601 = vsel %vm600, %v592, %v597
        %v602 = vrsqrt.pop %v532
        %v603 = vmul.f32 %v602, %v532
        %v604 = vmul.f32 %v603, %v602
        %v605 = vmul.f32 0.5, %v604
        %v606 = vsub.f32 1.5, %v605
        %v607 = vmul.f32 %v602, %v606
        %vm608 = vweird.f32 %v532
        %vm609 = vweird.f32 %v602
        %vm610 = vmor %vm608, %vm609
        %v611 = vsel %vm610, %v602, %v607
        %v612 = vrsqrt.pop %v533
        %v613 = vmul.f32 %v612, %v533
        %v614 = vmul.f32 %v613, %v612
        %v615 = vmul.f32 0.5, %v614
        %v616 = vsub.f32 1.5, %v615
        %v617 = vmul.f32 %v612, %v616
        %vm618 = vweird.f32 %v533
        %vm619 = vweird.f32 %v612
        %vm620 = vmor %vm618, %vm619
        %v621 = vsel %vm620, %v612, %v617
        %v622 = vrsqrt.pop %v534
        %v623 = vmul.f32 %v622, %v534
        %v624 = vmul.f32 %v623, %v622
        %v625 = vmul.f32 0.5, %v624
        %v626 = vsub.f32 1.5, %v625
        %v627 = vmul.f32 %v622, %v626
        %vm628 = vweird.f32 %v534
        %vm629 = vweird.f32 %v622
        %vm630 = vmor %vm628, %vm629
        %v631 = vsel %vm630, %v622, %v627
        %v632 = vrsqrt.pop %v535
        %v633 = vmul.f32 %v632, %v535
        %v634 = vmul.f32 %v633, %v632
        %v635 = vmul.f32 0.5, %v634
        %v636 = vsub.f32 1.5, %v635
        %v637 = vmul.f32 %v632, %v636
        %vm638 = vweird.f32 %v535
        %vm639 = vweird.f32 %v632
        %vm640 = vmor %vm638, %vm639
        %v641 = vsel %vm640, %v632, %v637
        %v642 = vrsqrt.pop %v536
        %v643 = vmul.f32 %v642, %v536
        %v644 = vmul.f32 %v643, %v642
        %v645 = vmul.f32 0.5, %v644
        %v646 = vsub.f32 1.5, %v645
        %v647 = vmul.f32 %v642, %v646
        %vm648 = vweird.f32 %v536
        %vm649 = vweird.f32 %v642
        %vm650 = vmor %vm648, %vm649
        %v651 = vsel %vm650, %v642, %v647
        %v652 = vrsqrt.pop %v537
        %v653 = vmul.f32 %v652, %v537
        %v654 = vmul.f32 %v653, %v652
        %v655 = vmul.f32 0.5, %v654
        %v656 = vsub.f32 1.5, %v655
        %v657 = vmul.f32 %v652, %v656
        %vm658 = vweird.f32 %v537
        %vm659 = vweird.f32 %v652
        %vm660 = vmor %vm658, %vm659
        %v661 = vsel %vm660, %v652, %v657
        %v662 = vrsqrt.pop %v538
        %v663 = vmul.f32 %v662, %v538
        %v664 = vmul.f32 %v663, %v662
        %v665 = vmul.f32 0.5, %v664
        %v666 = vsub.f32 1.5, %v665
        %v667 = vmul.f32 %v662, %v666
        %vm668 = vweird.f32 %v538
        %vm669 = vweird.f32 %v662
        %vm670 = vmor %vm668, %vm669
        %v671 = vsel %vm670, %v662, %v667
        %v672 = vrsqrt.pop %v539
        %v673 = vmul.f32 %v672, %v539
        %v674 = vmul.f32 %v673, %v672
        %v675 = vmul.f32 0.5, %v674
        %v676 = vsub.f32 1.5, %v675
        %v677 = vmul.f32 %v672, %v676
        %vm678 = vweird.f32 %v539
        %vm679 = vweird.f32 %v672
        %vm680 = vmor %vm678, %vm679
        %v681 = vsel %vm680, %v672, %v677
        %v682 = vrsqrt.pop %v540
        %v683 = vmul.f32 %v682, %v540
        %v684 = vmul.f32 %v683, %v682
        %v685 = vmul.f32 0.5, %v684
        %v686 = vsub.f32 1.5, %v685
        %v687 = vmul.f32 %v682, %v686
        %vm688 = vweird.f32 %v540
        %vm689 = vweird.f32 %v682
        %vm690 = vmor %vm688, %vm689
        %v691 = vsel %vm690, %v682, %v687
        %v692 = vrsqrt.pop %v541
        %v693 = vmul.f32 %v692, %v541
        %v694 = vmul.f32 %v693, %v692
        %v695 = vmul.f32 0.5, %v694
        %v696 = vsub.f32 1.5, %v695
        %v697 = vmul.f32 %v692, %v696
        %vm698 = vweird.f32 %v541
        %vm699 = vweird.f32 %v692
        %vm700 = vmor %vm698, %vm699
        %v701 = vsel %vm700, %v692, %v697
        %v702 = vmul.f32 %v495, %v551
        %v703 = vmul.f32 %v497, %v561
        %v704 = vmul.f32 %v499, %v571
        %v705 = vmul.f32 %v501, %v581
        %v706 = vmul.f32 %v503, %v591
        %v707 = vmul.f32 %v505, %v601
        %v708 = vmul.f32 %v507, %v611
        %v709 = vmul.f32 %v509, %v621
        %v710 = vmul.f32 %v511, %v631
        %v711 = vmul.f32 %v513, %v641
        %v712 = vmul.f32 %v515, %v651
        %v713 = vmul.f32 %v517, %v661
        %v714 = vmul.f32 %v519, %v671
        %v715 = vmul.f32 %v521, %v681
        %v716 = vmul.f32 %v523, %v691
        %v717 = vmul.f32 %v525, %v701
        %v718 = vmul.f32 %v462, %v443
        %v719 = vmul.f32 %v463, %v444
        %v720 = vmul.f32 %v464, %v445
        %v721 = vmul.f32 %v465, %v446
        %v722 = vmul.f32 %v466, %v447
        %v723 = vmul.f32 %v467, %v448
        %v724 = vmul.f32 %v468, %v449
        %v725 = vmul.f32 %v469, %v450
        %v726 = vmul.f32 %v470, %v451
        %v727 = vmul.f32 %v471, %v452
        %v728 = vmul.f32 %v472, %v453
        %v729 = vmul.f32 %v473, %v454
        %v730 = vmul.f32 %v474, %v455
        %v731 = vmul.f32 %v475, %v456
        %v732 = vmul.f32 %v476, %v457
        %v733 = vmul.f32 %v477, %v458
        %734 = vadd.xlane.f32.xlu0 %v718
        %v735 = vpop.xlane.xlu0 %734
        %736 = vadd.xlane.f32.xlu0 %v719
        %v737 = vpop.xlane.xlu0 %736
        %738 = vadd.xlane.f32.xlu0 %v720
        %v739 = vpop.xlane.xlu0 %738
        %740 = vadd.xlane.f32.xlu0 %v721
        %v741 = vpop.xlane.xlu0 %740
        %742 = vadd.xlane.f32.xlu0 %v722
        %v743 = vpop.xlane.xlu0 %742
        %744 = vadd.xlane.f32.xlu0 %v723
        %v745 = vpop.xlane.xlu0 %744
        %746 = vadd.xlane.f32.xlu0 %v724
        %v747 = vpop.xlane.xlu0 %746
        %748 = vadd.xlane.f32.xlu0 %v725
        %v749 = vpop.xlane.xlu0 %748
        %750 = vadd.xlane.f32.xlu0 %v726
        %v751 = vpop.xlane.xlu0 %750
        %752 = vadd.xlane.f32.xlu0 %v727
        %v753 = vpop.xlane.xlu0 %752
        %754 = vadd.xlane.f32.xlu0 %v728
        %v755 = vpop.xlane.xlu0 %754
        %756 = vadd.xlane.f32.xlu0 %v729
        %v757 = vpop.xlane.xlu0 %756
        %758 = vadd.xlane.f32.xlu0 %v730
        %v759 = vpop.xlane.xlu0 %758
        %760 = vadd.xlane.f32.xlu0 %v731
        %v761 = vpop.xlane.xlu0 %760
        %762 = vadd.xlane.f32.xlu0 %v732
        %v763 = vpop.xlane.xlu0 %762
        %764 = vadd.xlane.f32.xlu0 %v733
        %v765 = vpop.xlane.xlu0 %764
        %v766 = vmul.f32 %v702, -0.2236068
        %v767 = vmul.f32 %v703, -0.2236068
        %v768 = vmul.f32 %v704, -0.2236068
        %v769 = vmul.f32 %v705, -0.2236068
        %v770 = vmul.f32 %v706, -0.2236068
        %v771 = vmul.f32 %v707, -0.2236068
        %v772 = vmul.f32 %v708, -0.2236068
        %v773 = vmul.f32 %v709, -0.2236068
        %v774 = vmul.f32 %v710, -0.2236068
        %v775 = vmul.f32 %v711, -0.2236068
        %v776 = vmul.f32 %v712, -0.2236068
        %v777 = vmul.f32 %v713, -0.2236068
        %v778 = vmul.f32 %v714, -0.2236068
        %v779 = vmul.f32 %v715, -0.2236068
        %v780 = vmul.f32 %v716, -0.2236068
        %v781 = vmul.f32 %v717, -0.2236068
        %v782 = vmul.f32 %v766, 1.442695
        %v783 = vpow.pop %v782
        %v784 = vmul.f32 %v767, 1.442695
        %v785 = vpow.pop %v784
        %v786 = vmul.f32 %v768, 1.442695
        %v787 = vpow.pop %v786
        %v788 = vmul.f32 %v769, 1.442695
        %v789 = vpow.pop %v788
        %v790 = vmul.f32 %v770, 1.442695
        %v791 = vpow.pop %v790
        %v792 = vmul.f32 %v771, 1.442695
        %v793 = vpow.pop %v792
        %v794 = vmul.f32 %v772, 1.442695
        %v795 = vpow.pop %v794
        %v796 = vmul.f32 %v773, 1.442695
        %v797 = vpow.pop %v796
        %v798 = vmul.f32 %v774, 1.442695
        %v799 = vpow.pop %v798
        %v800 = vmul.f32 %v775, 1.442695
        %v801 = vpow.pop %v800
        %v802 = vmul.f32 %v776, 1.442695
        %v803 = vpow.pop %v802
        %v804 = vmul.f32 %v777, 1.442695
        %v805 = vpow.pop %v804
        %v806 = vmul.f32 %v778, 1.442695
        %v807 = vpow.pop %v806
        %v808 = vmul.f32 %v779, 1.442695
        %v809 = vpow.pop %v808
        %v810 = vmul.f32 %v780, 1.442695
        %v811 = vpow.pop %v810
        %v812 = vmul.f32 %v781, 1.442695
        %v813 = vpow.pop %v812
        %v814 = vmul.f32 %v783, 0.00083333335
        %v815 = vmul.f32 %v785, 0.00083333335
        %v816 = vmul.f32 %v787, 0.00083333335
        %v817 = vmul.f32 %v789, 0.00083333335
        %v818 = vmul.f32 %v791, 0.00083333335
        %v819 = vmul.f32 %v793, 0.00083333335
        %v820 = vmul.f32 %v795, 0.00083333335
        %v821 = vmul.f32 %v797, 0.00083333335
        %v822 = vmul.f32 %v799, 0.00083333335
        %v823 = vmul.f32 %v801, 0.00083333335
        %v824 = vmul.f32 %v803, 0.00083333335
        %v825 = vmul.f32 %v805, 0.00083333335
        %v826 = vmul.f32 %v807, 0.00083333335
        %v827 = vmul.f32 %v809, 0.00083333335
        %v828 = vmul.f32 %v811, 0.00083333335
        %v829 = vmul.f32 %v813, 0.00083333335
        %v830 = vmul.f32 %v702, 0.2236068
        %v831 = vmul.f32 %v703, 0.2236068
        %v832 = vmul.f32 %v704, 0.2236068
        %v833 = vmul.f32 %v705, 0.2236068
        %v834 = vmul.f32 %v706, 0.2236068
        %v835 = vmul.f32 %v707, 0.2236068
        %v836 = vmul.f32 %v708, 0.2236068
        %v837 = vmul.f32 %v709, 0.2236068
        %v838 = vmul.f32 %v710, 0.2236068
        %v839 = vmul.f32 %v711, 0.2236068
        %v840 = vmul.f32 %v712, 0.2236068
        %v841 = vmul.f32 %v713, 0.2236068
        %v842 = vmul.f32 %v714, 0.2236068
        %v843 = vmul.f32 %v715, 0.2236068
        %v844 = vmul.f32 %v716, 0.2236068
        %v845 = vmul.f32 %v717, 0.2236068
        %v846 = vadd.f32 %v830, 1.0
        %v847 = vadd.f32 %v831, 1.0
        %v848 = vadd.f32 %v832, 1.0
        %v849 = vadd.f32 %v833, 1.0
        %v850 = vadd.f32 %v834, 1.0
        %v851 = vadd.f32 %v835, 1.0
        %v852 = vadd.f32 %v836, 1.0
        %v853 = vadd.f32 %v837, 1.0
        %v854 = vadd.f32 %v838, 1.0
        %v855 = vadd.f32 %v839, 1.0
        %v856 = vadd.f32 %v840, 1.0
        %v857 = vadd.f32 %v841, 1.0
        %v858 = vadd.f32 %v842, 1.0
        %v859 = vadd.f32 %v843, 1.0
        %v860 = vadd.f32 %v844, 1.0
        %v861 = vadd.f32 %v845, 1.0
        %v862 = vmul.f32 %v814, %v846
        %v863 = vmul.f32 %v815, %v847
        %v864 = vmul.f32 %v816, %v848
        %v865 = vmul.f32 %v817, %v849
        %v866 = vmul.f32 %v818, %v850
        %v867 = vmul.f32 %v819, %v851
        %v868 = vmul.f32 %v820, %v852
        %v869 = vmul.f32 %v821, %v853
        %v870 = vmul.f32 %v822, %v854
        %v871 = vmul.f32 %v823, %v855
        %v872 = vmul.f32 %v824, %v856
        %v873 = vmul.f32 %v825, %v857
        %v874 = vmul.f32 %v826, %v858
        %v875 = vmul.f32 %v827, %v859
        %v876 = vmul.f32 %v828, %v860
        %v877 = vmul.f32 %v829, %v861
        %v878 = vmul.f32 %v862, 20.0
        %v879 = vmul.f32 %v863, 20.0
        %v880 = vmul.f32 %v864, 20.0
        %v881 = vmul.f32 %v865, 20.0
        %v882 = vmul.f32 %v866, 20.0
        %v883 = vmul.f32 %v867, 20.0
        %v884 = vmul.f32 %v868, 20.0
        %v885 = vmul.f32 %v869, 20.0
        %v886 = vmul.f32 %v870, 20.0
        %v887 = vmul.f32 %v871, 20.0
        %v888 = vmul.f32 %v872, 20.0
        %v889 = vmul.f32 %v873, 20.0
        %v890 = vmul.f32 %v874, 20.0
        %v891 = vmul.f32 %v875, 20.0
        %v892 = vmul.f32 %v876, 20.0
        %v893 = vmul.f32 %v877, 20.0
        %v894 = vmul.f32 %v878, %v735
        %v895 = vmul.f32 %v879, %v737
        %v896 = vmul.f32 %v880, %v739
        %v897 = vmul.f32 %v881, %v741
        %v898 = vmul.f32 %v882, %v743
        %v899 = vmul.f32 %v883, %v745
        %v900 = vmul.f32 %v884, %v747
        %v901 = vmul.f32 %v885, %v749
        %v902 = vmul.f32 %v886, %v751
        %v903 = vmul.f32 %v887, %v753
        %v904 = vmul.f32 %v888, %v755
        %v905 = vmul.f32 %v889, %v757
        %v906 = vmul.f32 %v890, %v759
        %v907 = vmul.f32 %v891, %v761
        %v908 = vmul.f32 %v892, %v763
        %v909 = vmul.f32 %v893, %v765
        %v910 = vmul.f32 %v814, %v735
        %v911 = vmul.f32 %v815, %v737
        %v912 = vmul.f32 %v816, %v739
        %v913 = vmul.f32 %v817, %v741
        %v914 = vmul.f32 %v818, %v743
        %v915 = vmul.f32 %v819, %v745
        %v916 = vmul.f32 %v820, %v747
        %v917 = vmul.f32 %v821, %v749
        %v918 = vmul.f32 %v822, %v751
        %v919 = vmul.f32 %v823, %v753
        %v920 = vmul.f32 %v824, %v755
        %v921 = vmul.f32 %v825, %v757
        %v922 = vmul.f32 %v826, %v759
        %v923 = vmul.f32 %v827, %v761
        %v924 = vmul.f32 %v828, %v763
        %v925 = vmul.f32 %v829, %v765
        %v926 = vld [vmem:[#allocation2] sm:$0x1]
        %v927 = vadd.f32 %v894, %v895
        %v928 = vadd.f32 %v927, %v896
        %v929 = vadd.f32 %v928, %v897
        %v930 = vadd.f32 %v929, %v898
        %v931 = vadd.f32 %v930, %v899
        %v932 = vadd.f32 %v931, %v900
        %v933 = vadd.f32 %v932, %v901
        %v934 = vadd.f32 %v933, %v902
        %v935 = vadd.f32 %v934, %v903
        %v936 = vadd.f32 %v935, %v904
        %v937 = vadd.f32 %v936, %v905
        %v938 = vadd.f32 %v937, %v906
        %v939 = vadd.f32 %v938, %v907
        %v940 = vadd.f32 %v939, %v908
        %v941 = vadd.f32 %v940, %v909
        %v942 = vrot.slane %v941, 4
        %v943 = vadd.f32 %v941, %v942
        %v944 = vrot.slane %v943, 2
        %v945 = vadd.f32 %v943, %v944
        %v946 = vrot.slane %v945, 1
        %v947 = vadd.f32 %v945, %v946
        %v948 = vadd.f32 %v926, %v947
        %vm949 = vcmask 0
        %950 = vst.msk [vmem:[#allocation2] sm:$0x1] %vm949, %v948
        %v951 = vld [vmem:[#allocation3] sm:$0x1]
        %v952 = vadd.f32 %v910, %v911
        %v953 = vadd.f32 %v952, %v912
        %v954 = vadd.f32 %v953, %v913
        %v955 = vadd.f32 %v954, %v914
        %v956 = vadd.f32 %v955, %v915
        %v957 = vadd.f32 %v956, %v916
        %v958 = vadd.f32 %v957, %v917
        %v959 = vadd.f32 %v958, %v918
        %v960 = vadd.f32 %v959, %v919
        %v961 = vadd.f32 %v960, %v920
        %v962 = vadd.f32 %v961, %v921
        %v963 = vadd.f32 %v962, %v922
        %v964 = vadd.f32 %v963, %v923
        %v965 = vadd.f32 %v964, %v924
        %v966 = vadd.f32 %v965, %v925
        %v967 = vrot.slane %v966, 4
        %v968 = vadd.f32 %v966, %v967
        %v969 = vrot.slane %v968, 2
        %v970 = vadd.f32 %v968, %v969
        %v971 = vrot.slane %v970, 1
        %v972 = vadd.f32 %v970, %v971
        %v973 = vadd.f32 %v951, %v972
        %974 = vst.msk [vmem:[#allocation3] sm:$0x1] %vm949, %v973
        %v975 = vld [vmem:[%s370] sm:$0x1]
        %v976 = vmul.f32 %v878, %v443
        %v977 = vmul.f32 %v879, %v444
        %v978 = vmul.f32 %v880, %v445
        %v979 = vmul.f32 %v881, %v446
        %v980 = vmul.f32 %v882, %v447
        %v981 = vmul.f32 %v883, %v448
        %v982 = vmul.f32 %v884, %v449
        %v983 = vmul.f32 %v885, %v450
        %v984 = vmul.f32 %v886, %v451
        %v985 = vmul.f32 %v887, %v452
        %v986 = vmul.f32 %v888, %v453
        %v987 = vmul.f32 %v889, %v454
        %v988 = vmul.f32 %v890, %v455
        %v989 = vmul.f32 %v891, %v456
        %v990 = vmul.f32 %v892, %v457
        %v991 = vmul.f32 %v893, %v458
        %v992 = vmul.f32 %v910, %v462
        %v993 = vmul.f32 %v911, %v463
        %v994 = vmul.f32 %v912, %v464
        %v995 = vmul.f32 %v913, %v465
        %v996 = vmul.f32 %v914, %v466
        %v997 = vmul.f32 %v915, %v467
        %v998 = vmul.f32 %v916, %v468
        %v999 = vmul.f32 %v917, %v469
        %v1000 = vmul.f32 %v918, %v470
        %v1001 = vmul.f32 %v919, %v471
        %v1002 = vmul.f32 %v920, %v472
        %v1003 = vmul.f32 %v921, %v473
        %v1004 = vmul.f32 %v922, %v474
        %v1005 = vmul.f32 %v923, %v475
        %v1006 = vmul.f32 %v924, %v476
        %v1007 = vmul.f32 %v925, %v477
        %v1008 = vsub.f32 %v976, %v992
        %v1009 = vsub.f32 %v977, %v993
        %v1010 = vsub.f32 %v978, %v994
        %v1011 = vsub.f32 %v979, %v995
        %v1012 = vsub.f32 %v980, %v996
        %v1013 = vsub.f32 %v981, %v997
        %v1014 = vsub.f32 %v982, %v998
        %v1015 = vsub.f32 %v983, %v999
        %v1016 = vsub.f32 %v984, %v1000
        %v1017 = vsub.f32 %v985, %v1001
        %v1018 = vsub.f32 %v986, %v1002
        %v1019 = vsub.f32 %v987, %v1003
        %v1020 = vsub.f32 %v988, %v1004
        %v1021 = vsub.f32 %v989, %v1005
        %v1022 = vsub.f32 %v990, %v1006
        %v1023 = vsub.f32 %v991, %v1007
        %v1024 = vadd.f32 %v1008, %v1009
        %v1025 = vadd.f32 %v1024, %v1010
        %v1026 = vadd.f32 %v1025, %v1011
        %v1027 = vadd.f32 %v1026, %v1012
        %v1028 = vadd.f32 %v1027, %v1013
        %v1029 = vadd.f32 %v1028, %v1014
        %v1030 = vadd.f32 %v1029, %v1015
        %v1031 = vadd.f32 %v1030, %v1016
        %v1032 = vadd.f32 %v1031, %v1017
        %v1033 = vadd.f32 %v1032, %v1018
        %v1034 = vadd.f32 %v1033, %v1019
        %v1035 = vadd.f32 %v1034, %v1020
        %v1036 = vadd.f32 %v1035, %v1021
        %v1037 = vadd.f32 %v1036, %v1022
        %v1038 = vadd.f32 %v1037, %v1023
        %v1039 = vrot.slane %v1038, 4
        %v1040 = vadd.f32 %v1038, %v1039
        %v1041 = vrot.slane %v1040, 2
        %v1042 = vadd.f32 %v1040, %v1041
        %v1043 = vrot.slane %v1042, 1
        %v1044 = vadd.f32 %v1042, %v1043
        %v1045 = vadd.f32 %v975, %v1044
        %1046 = vst [vmem:[%s370] sm:$0x1] %v1045
        %1047 = vmatpush.msra.mxu0 %v426
        %1048 = vmatpush.msra.mxu0 %v425
        %1049 = vmatpush.msra.mxu0 %v424
        %1050 = vmatpush.msra.mxu0 %v423
        %1051 = vmatpush.msra.mxu0 %v422
        %1052 = vmatpush.msra.mxu0 %v421
        %1053 = vmatpush.msra.mxu0 %v420
        %1054 = vmatpush.msra.mxu0 %v419
        %1055 = vmatpush.msra.mxu0 %v418
        %1056 = vmatpush.msra.mxu0 %v417
        %1057 = vmatpush.msra.mxu0 %v416
        %1058 = vmatpush.msra.mxu0 %v415
        %1059 = vmatpush.msra.mxu0 %v414
        %1060 = vmatpush.msra.mxu0 %v413
        %1061 = vmatpush.msra.mxu0 %v412
        %1062 = vmatpush.msra.mxu0 %v411
        %1063 = vmatmul.f32.gmra.mxu0 %v462
        %v1064 = vpop.f32.mrf.mxu0
        %v1065 = vadd.f32 0.0, %v1064
        %1066 = vmatmul.f32.gmra.mxu0 %v463
        %v1067 = vpop.f32.mrf.mxu0
        %v1068 = vadd.f32 0.0, %v1067
        %1069 = vmatmul.f32.gmra.mxu0 %v464
        %v1070 = vpop.f32.mrf.mxu0
        %v1071 = vadd.f32 0.0, %v1070
        %1072 = vmatmul.f32.gmra.mxu0 %v465
        %v1073 = vpop.f32.mrf.mxu0
        %v1074 = vadd.f32 0.0, %v1073
        %1075 = vmatmul.f32.gmra.mxu0 %v466
        %v1076 = vpop.f32.mrf.mxu0
        %v1077 = vadd.f32 0.0, %v1076
        %1078 = vmatmul.f32.gmra.mxu0 %v467
        %v1079 = vpop.f32.mrf.mxu0
        %v1080 = vadd.f32 0.0, %v1079
        %1081 = vmatmul.f32.gmra.mxu0 %v468
        %v1082 = vpop.f32.mrf.mxu0
        %v1083 = vadd.f32 0.0, %v1082
        %1084 = vmatmul.f32.gmra.mxu0 %v469
        %v1085 = vpop.f32.mrf.mxu0
        %v1086 = vadd.f32 0.0, %v1085
        %1087 = vmatmul.f32.gmra.mxu0 %v470
        %v1088 = vpop.f32.mrf.mxu0
        %v1089 = vadd.f32 0.0, %v1088
        %1090 = vmatmul.f32.gmra.mxu0 %v471
        %v1091 = vpop.f32.mrf.mxu0
        %v1092 = vadd.f32 0.0, %v1091
        %1093 = vmatmul.f32.gmra.mxu0 %v472
        %v1094 = vpop.f32.mrf.mxu0
        %v1095 = vadd.f32 0.0, %v1094
        %1096 = vmatmul.f32.gmra.mxu0 %v473
        %v1097 = vpop.f32.mrf.mxu0
        %v1098 = vadd.f32 0.0, %v1097
        %1099 = vmatmul.f32.gmra.mxu0 %v474
        %v1100 = vpop.f32.mrf.mxu0
        %v1101 = vadd.f32 0.0, %v1100
        %1102 = vmatmul.f32.gmra.mxu0 %v475
        %v1103 = vpop.f32.mrf.mxu0
        %v1104 = vadd.f32 0.0, %v1103
        %1105 = vmatmul.f32.gmra.mxu0 %v476
        %v1106 = vpop.f32.mrf.mxu0
        %v1107 = vadd.f32 0.0, %v1106
        %1108 = vmatmul.f32.gmra.mxu0 %v477
        %v1109 = vpop.f32.mrf.mxu0
        %v1110 = vadd.f32 0.0, %v1109
        %1111 = vdwg.mxu0
        %1112 = vmatpush.msra.mxu0 %v426
        %1113 = vmatpush.msra.mxu0 %v425
        %1114 = vmatpush.msra.mxu0 %v424
        %1115 = vmatpush.msra.mxu0 %v423
        %1116 = vmatpush.msra.mxu0 %v422
        %1117 = vmatpush.msra.mxu0 %v421
        %1118 = vmatpush.msra.mxu0 %v420
        %1119 = vmatpush.msra.mxu0 %v419
        %1120 = vmatpush.msra.mxu0 %v418
        %1121 = vmatpush.msra.mxu0 %v417
        %1122 = vmatpush.msra.mxu0 %v416
        %1123 = vmatpush.msra.mxu0 %v415
        %1124 = vmatpush.msra.mxu0 %v414
        %1125 = vmatpush.msra.mxu0 %v413
        %1126 = vmatpush.msra.mxu0 %v412
        %1127 = vmatpush.msra.mxu0 %v411
        %1128 = vmatmul.f32.gmra.mxu0 %v443
        %v1129 = vpop.f32.mrf.mxu0
        %v1130 = vadd.f32 0.0, %v1129
        %1131 = vmatmul.f32.gmra.mxu0 %v444
        %v1132 = vpop.f32.mrf.mxu0
        %v1133 = vadd.f32 0.0, %v1132
        %1134 = vmatmul.f32.gmra.mxu0 %v445
        %v1135 = vpop.f32.mrf.mxu0
        %v1136 = vadd.f32 0.0, %v1135
        %1137 = vmatmul.f32.gmra.mxu0 %v446
        %v1138 = vpop.f32.mrf.mxu0
        %v1139 = vadd.f32 0.0, %v1138
        %1140 = vmatmul.f32.gmra.mxu0 %v447
        %v1141 = vpop.f32.mrf.mxu0
        %v1142 = vadd.f32 0.0, %v1141
        %1143 = vmatmul.f32.gmra.mxu0 %v448
        %v1144 = vpop.f32.mrf.mxu0
        %v1145 = vadd.f32 0.0, %v1144
        %1146 = vmatmul.f32.gmra.mxu0 %v449
        %v1147 = vpop.f32.mrf.mxu0
        %v1148 = vadd.f32 0.0, %v1147
        %1149 = vmatmul.f32.gmra.mxu0 %v450
        %v1150 = vpop.f32.mrf.mxu0
        %v1151 = vadd.f32 0.0, %v1150
        %1152 = vmatmul.f32.gmra.mxu0 %v451
        %v1153 = vpop.f32.mrf.mxu0
        %v1154 = vadd.f32 0.0, %v1153
        %1155 = vmatmul.f32.gmra.mxu0 %v452
        %v1156 = vpop.f32.mrf.mxu0
        %v1157 = vadd.f32 0.0, %v1156
        %1158 = vmatmul.f32.gmra.mxu0 %v453
        %v1159 = vpop.f32.mrf.mxu0
        %v1160 = vadd.f32 0.0, %v1159
        %1161 = vmatmul.f32.gmra.mxu0 %v454
        %v1162 = vpop.f32.mrf.mxu0
        %v1163 = vadd.f32 0.0, %v1162
        %1164 = vmatmul.f32.gmra.mxu0 %v455
        %v1165 = vpop.f32.mrf.mxu0
        %v1166 = vadd.f32 0.0, %v1165
        %1167 = vmatmul.f32.gmra.mxu0 %v456
        %v1168 = vpop.f32.mrf.mxu0
        %v1169 = vadd.f32 0.0, %v1168
        %1170 = vmatmul.f32.gmra.mxu0 %v457
        %v1171 = vpop.f32.mrf.mxu0
        %v1172 = vadd.f32 0.0, %v1171
        %1173 = vmatmul.f32.gmra.mxu0 %v458
        %v1174 = vpop.f32.mrf.mxu0
        %v1175 = vadd.f32 0.0, %v1174
        %1176 = vdwg.mxu0
        %v1177 = vmul.f32 %v551, 0.2236068
        %v1178 = vmul.f32 %v561, 0.2236068
        %v1179 = vmul.f32 %v571, 0.2236068
        %v1180 = vmul.f32 %v581, 0.2236068
        %v1181 = vmul.f32 %v591, 0.2236068
        %v1182 = vmul.f32 %v601, 0.2236068
        %v1183 = vmul.f32 %v611, 0.2236068
        %v1184 = vmul.f32 %v621, 0.2236068
        %v1185 = vmul.f32 %v631, 0.2236068
        %v1186 = vmul.f32 %v641, 0.2236068
        %v1187 = vmul.f32 %v651, 0.2236068
        %v1188 = vmul.f32 %v661, 0.2236068
        %v1189 = vmul.f32 %v671, 0.2236068
        %v1190 = vmul.f32 %v681, 0.2236068
        %v1191 = vmul.f32 %v691, 0.2236068
        %v1192 = vmul.f32 %v701, 0.2236068
        %v1193 = vmul.f32 %v910, %v1177
        %v1194 = vmul.f32 %v911, %v1178
        %v1195 = vmul.f32 %v912, %v1179
        %v1196 = vmul.f32 %v913, %v1180
        %v1197 = vmul.f32 %v914, %v1181
        %v1198 = vmul.f32 %v915, %v1182
        %v1199 = vmul.f32 %v916, %v1183
        %v1200 = vmul.f32 %v917, %v1184
        %v1201 = vmul.f32 %v918, %v1185
        %v1202 = vmul.f32 %v919, %v1186
        %v1203 = vmul.f32 %v920, %v1187
        %v1204 = vmul.f32 %v921, %v1188
        %v1205 = vmul.f32 %v922, %v1189
        %v1206 = vmul.f32 %v923, %v1190
        %v1207 = vmul.f32 %v924, %v1191
        %v1208 = vmul.f32 %v925, %v1192
        %v1209 = vld [vmem:[%s383] sm:$0xff]
        %v1210 = vld [vmem:[%s383 + $0x8] sm:$0xff]
        %v1211 = vld [vmem:[%s383 + $0x10] sm:$0xff]
        %v1212 = vld [vmem:[%s383 + $0x18] sm:$0xff]
        %v1213 = vld [vmem:[%s383 + $0x20] sm:$0xff]
        %v1214 = vld [vmem:[%s383 + $0x28] sm:$0xff]
        %v1215 = vld [vmem:[%s383 + $0x30] sm:$0xff]
        %v1216 = vld [vmem:[%s383 + $0x38] sm:$0xff]
        %v1217 = vld [vmem:[%s383 + $0x40] sm:$0xff]
        %v1218 = vld [vmem:[%s383 + $0x48] sm:$0xff]
        %v1219 = vld [vmem:[%s383 + $0x50] sm:$0xff]
        %v1220 = vld [vmem:[%s383 + $0x58] sm:$0xff]
        %v1221 = vld [vmem:[%s383 + $0x60] sm:$0xff]
        %v1222 = vld [vmem:[%s383 + $0x68] sm:$0xff]
        %v1223 = vld [vmem:[%s383 + $0x70] sm:$0xff]
        %v1224 = vld [vmem:[%s383 + $0x78] sm:$0xff]
        %v1225 = vmul.f32 %v1193, %v1065
        %v1226 = vmul.f32 %v1194, %v1068
        %v1227 = vmul.f32 %v1195, %v1071
        %v1228 = vmul.f32 %v1196, %v1074
        %v1229 = vmul.f32 %v1197, %v1077
        %v1230 = vmul.f32 %v1198, %v1080
        %v1231 = vmul.f32 %v1199, %v1083
        %v1232 = vmul.f32 %v1200, %v1086
        %v1233 = vmul.f32 %v1201, %v1089
        %v1234 = vmul.f32 %v1202, %v1092
        %v1235 = vmul.f32 %v1203, %v1095
        %v1236 = vmul.f32 %v1204, %v1098
        %v1237 = vmul.f32 %v1205, %v1101
        %v1238 = vmul.f32 %v1206, %v1104
        %v1239 = vmul.f32 %v1207, %v1107
        %v1240 = vmul.f32 %v1208, %v1110
        %v1241 = vmul.f32 %v814, %v1130
        %v1242 = vmul.f32 %v815, %v1133
        %v1243 = vmul.f32 %v816, %v1136
        %v1244 = vmul.f32 %v817, %v1139
        %v1245 = vmul.f32 %v818, %v1142
        %v1246 = vmul.f32 %v819, %v1145
        %v1247 = vmul.f32 %v820, %v1148
        %v1248 = vmul.f32 %v821, %v1151
        %v1249 = vmul.f32 %v822, %v1154
        %v1250 = vmul.f32 %v823, %v1157
        %v1251 = vmul.f32 %v824, %v1160
        %v1252 = vmul.f32 %v825, %v1163
        %v1253 = vmul.f32 %v826, %v1166
        %v1254 = vmul.f32 %v827, %v1169
        %v1255 = vmul.f32 %v828, %v1172
        %v1256 = vmul.f32 %v829, %v1175
        %v1257 = vsub.f32 %v1225, %v1241
        %v1258 = vsub.f32 %v1226, %v1242
        %v1259 = vsub.f32 %v1227, %v1243
        %v1260 = vsub.f32 %v1228, %v1244
        %v1261 = vsub.f32 %v1229, %v1245
        %v1262 = vsub.f32 %v1230, %v1246
        %v1263 = vsub.f32 %v1231, %v1247
        %v1264 = vsub.f32 %v1232, %v1248
        %v1265 = vsub.f32 %v1233, %v1249
        %v1266 = vsub.f32 %v1234, %v1250
        %v1267 = vsub.f32 %v1235, %v1251
        %v1268 = vsub.f32 %v1236, %v1252
        %v1269 = vsub.f32 %v1237, %v1253
        %v1270 = vsub.f32 %v1238, %v1254
        %v1271 = vsub.f32 %v1239, %v1255
        %v1272 = vsub.f32 %v1240, %v1256
        %1273 = vxpose.xlu0.b32.start [1/16] %v1257, 128
        %1274 = vxpose.xlu0.b32.cont [2/16] %v1258, 128
        %1275 = vxpose.xlu0.b32.cont [3/16] %v1259, 128
        %1276 = vxpose.xlu0.b32.cont [4/16] %v1260, 128
        %1277 = vxpose.xlu0.b32.cont [5/16] %v1261, 128
        %1278 = vxpose.xlu0.b32.cont [6/16] %v1262, 128
        %1279 = vxpose.xlu0.b32.cont [7/16] %v1263, 128
        %1280 = vxpose.xlu0.b32.cont [8/16] %v1264, 128
        %1281 = vxpose.xlu0.b32.cont [9/16] %v1265, 128
        %1282 = vxpose.xlu0.b32.cont [10/16] %v1266, 128
        %1283 = vxpose.xlu0.b32.cont [11/16] %v1267, 128
        %1284 = vxpose.xlu0.b32.cont [12/16] %v1268, 128
        %1285 = vxpose.xlu0.b32.cont [13/16] %v1269, 128
        %1286 = vxpose.xlu0.b32.cont [14/16] %v1270, 128
        %1287 = vxpose.xlu0.b32.cont [15/16] %v1271, 128
        %1288 = vxpose.xlu0.b32.end [16/16] %v1272, 128
        %v1289 = vpop.trf.xlu0
        %v1290 = vpop.trf.xlu0
        %v1291 = vpop.trf.xlu0
        %v1292 = vpop.trf.xlu0
        %v1293 = vpop.trf.xlu0
        %v1294 = vpop.trf.xlu0
        %v1295 = vpop.trf.xlu0
        %v1296 = vpop.trf.xlu0
        %v1297 = vpop.trf.xlu0
        %v1298 = vpop.trf.xlu0
        %v1299 = vpop.trf.xlu0
        %v1300 = vpop.trf.xlu0
        %v1301 = vpop.trf.xlu0
        %v1302 = vpop.trf.xlu0
        %v1303 = vpop.trf.xlu0
        %v1304 = vpop.trf.xlu0
        %1305 = vmatpush.msra.mxu0 %v1110
        %1306 = vmatpush.msra.mxu0 %v1107
        %1307 = vmatpush.msra.mxu0 %v1104
        %1308 = vmatpush.msra.mxu0 %v1101
        %1309 = vmatpush.msra.mxu0 %v1098
        %1310 = vmatpush.msra.mxu0 %v1095
        %1311 = vmatpush.msra.mxu0 %v1092
        %1312 = vmatpush.msra.mxu0 %v1089
        %1313 = vmatpush.msra.mxu0 %v1086
        %1314 = vmatpush.msra.mxu0 %v1083
        %1315 = vmatpush.msra.mxu0 %v1080
        %1316 = vmatpush.msra.mxu0 %v1077
        %1317 = vmatpush.msra.mxu0 %v1074
        %1318 = vmatpush.msra.mxu0 %v1071
        %1319 = vmatpush.msra.mxu0 %v1068
        %1320 = vmatpush.msra.mxu0 %v1065
        %1321 = vmatmul.f32.gmra.mxu0 %v1289
        %v1322 = vpop.f32.mrf.mxu0
        %v1323 = vadd.f32 0.0, %v1322
        %1324 = vmatmul.f32.gmra.mxu0 %v1290
        %v1325 = vpop.f32.mrf.mxu0
        %v1326 = vadd.f32 0.0, %v1325
        %1327 = vmatmul.f32.gmra.mxu0 %v1291
        %v1328 = vpop.f32.mrf.mxu0
        %v1329 = vadd.f32 0.0, %v1328
        %1330 = vmatmul.f32.gmra.mxu0 %v1292
        %v1331 = vpop.f32.mrf.mxu0
        %v1332 = vadd.f32 0.0, %v1331
        %1333 = vmatmul.f32.gmra.mxu0 %v1293
        %v1334 = vpop.f32.mrf.mxu0
        %v1335 = vadd.f32 0.0, %v1334
        %1336 = vmatmul.f32.gmra.mxu0 %v1294
        %v1337 = vpop.f32.mrf.mxu0
        %v1338 = vadd.f32 0.0, %v1337
        %1339 = vmatmul.f32.gmra.mxu0 %v1295
        %v1340 = vpop.f32.mrf.mxu0
        %v1341 = vadd.f32 0.0, %v1340
        %1342 = vmatmul.f32.gmra.mxu0 %v1296
        %v1343 = vpop.f32.mrf.mxu0
        %v1344 = vadd.f32 0.0, %v1343
        %1345 = vmatmul.f32.gmra.mxu0 %v1297
        %v1346 = vpop.f32.mrf.mxu0
        %v1347 = vadd.f32 0.0, %v1346
        %1348 = vmatmul.f32.gmra.mxu0 %v1298
        %v1349 = vpop.f32.mrf.mxu0
        %v1350 = vadd.f32 0.0, %v1349
        %1351 = vmatmul.f32.gmra.mxu0 %v1299
        %v1352 = vpop.f32.mrf.mxu0
        %v1353 = vadd.f32 0.0, %v1352
        %1354 = vmatmul.f32.gmra.mxu0 %v1300
        %v1355 = vpop.f32.mrf.mxu0
        %v1356 = vadd.f32 0.0, %v1355
        %1357 = vmatmul.f32.gmra.mxu0 %v1301
        %v1358 = vpop.f32.mrf.mxu0
        %v1359 = vadd.f32 0.0, %v1358
        %1360 = vmatmul.f32.gmra.mxu0 %v1302
        %v1361 = vpop.f32.mrf.mxu0
        %v1362 = vadd.f32 0.0, %v1361
        %1363 = vmatmul.f32.gmra.mxu0 %v1303
        %v1364 = vpop.f32.mrf.mxu0
        %v1365 = vadd.f32 0.0, %v1364
        %1366 = vmatmul.f32.gmra.mxu0 %v1304
        %v1367 = vpop.f32.mrf.mxu0
        %v1368 = vadd.f32 0.0, %v1367
        %1369 = vdwg.mxu0
        %v1370 = vmul.f32 %v814, %v1065
        %v1371 = vmul.f32 %v815, %v1068
        %v1372 = vmul.f32 %v816, %v1071
        %v1373 = vmul.f32 %v817, %v1074
        %v1374 = vmul.f32 %v818, %v1077
        %v1375 = vmul.f32 %v819, %v1080
        %v1376 = vmul.f32 %v820, %v1083
        %v1377 = vmul.f32 %v821, %v1086
        %v1378 = vmul.f32 %v822, %v1089
        %v1379 = vmul.f32 %v823, %v1092
        %v1380 = vmul.f32 %v824, %v1095
        %v1381 = vmul.f32 %v825, %v1098
        %v1382 = vmul.f32 %v826, %v1101
        %v1383 = vmul.f32 %v827, %v1104
        %v1384 = vmul.f32 %v828, %v1107
        %v1385 = vmul.f32 %v829, %v1110
        %1386 = vxpose.xlu0.b32.start [1/16] %v1370, 128
        %1387 = vxpose.xlu0.b32.cont [2/16] %v1371, 128
        %1388 = vxpose.xlu0.b32.cont [3/16] %v1372, 128
        %1389 = vxpose.xlu0.b32.cont [4/16] %v1373, 128
        %1390 = vxpose.xlu0.b32.cont [5/16] %v1374, 128
        %1391 = vxpose.xlu0.b32.cont [6/16] %v1375, 128
        %1392 = vxpose.xlu0.b32.cont [7/16] %v1376, 128
        %1393 = vxpose.xlu0.b32.cont [8/16] %v1377, 128
        %1394 = vxpose.xlu0.b32.cont [9/16] %v1378, 128
        %1395 = vxpose.xlu0.b32.cont [10/16] %v1379, 128
        %1396 = vxpose.xlu0.b32.cont [11/16] %v1380, 128
        %1397 = vxpose.xlu0.b32.cont [12/16] %v1381, 128
        %1398 = vxpose.xlu0.b32.cont [13/16] %v1382, 128
        %1399 = vxpose.xlu0.b32.cont [14/16] %v1383, 128
        %1400 = vxpose.xlu0.b32.cont [15/16] %v1384, 128
        %1401 = vxpose.xlu0.b32.end [16/16] %v1385, 128
        %v1402 = vpop.trf.xlu0
        %v1403 = vpop.trf.xlu0
        %v1404 = vpop.trf.xlu0
        %v1405 = vpop.trf.xlu0
        %v1406 = vpop.trf.xlu0
        %v1407 = vpop.trf.xlu0
        %v1408 = vpop.trf.xlu0
        %v1409 = vpop.trf.xlu0
        %v1410 = vpop.trf.xlu0
        %v1411 = vpop.trf.xlu0
        %v1412 = vpop.trf.xlu0
        %v1413 = vpop.trf.xlu0
        %v1414 = vpop.trf.xlu0
        %v1415 = vpop.trf.xlu0
        %v1416 = vpop.trf.xlu0
        %v1417 = vpop.trf.xlu0
        %1418 = vmatpush.msra.mxu0 %v1175
        %1419 = vmatpush.msra.mxu0 %v1172
        %1420 = vmatpush.msra.mxu0 %v1169
        %1421 = vmatpush.msra.mxu0 %v1166
        %1422 = vmatpush.msra.mxu0 %v1163
        %1423 = vmatpush.msra.mxu0 %v1160
        %1424 = vmatpush.msra.mxu0 %v1157
        %1425 = vmatpush.msra.mxu0 %v1154
        %1426 = vmatpush.msra.mxu0 %v1151
        %1427 = vmatpush.msra.mxu0 %v1148
        %1428 = vmatpush.msra.mxu0 %v1145
        %1429 = vmatpush.msra.mxu0 %v1142
        %1430 = vmatpush.msra.mxu0 %v1139
        %1431 = vmatpush.msra.mxu0 %v1136
        %1432 = vmatpush.msra.mxu0 %v1133
        %1433 = vmatpush.msra.mxu0 %v1130
        %1434 = vmatmul.f32.gmra.mxu0 %v1402
        %v1435 = vpop.f32.mrf.mxu0
        %v1436 = vadd.f32 0.0, %v1435
        %1437 = vmatmul.f32.gmra.mxu0 %v1403
        %v1438 = vpop.f32.mrf.mxu0
        %v1439 = vadd.f32 0.0, %v1438
        %1440 = vmatmul.f32.gmra.mxu0 %v1404
        %v1441 = vpop.f32.mrf.mxu0
        %v1442 = vadd.f32 0.0, %v1441
        %1443 = vmatmul.f32.gmra.mxu0 %v1405
        %v1444 = vpop.f32.mrf.mxu0
        %v1445 = vadd.f32 0.0, %v1444
        %1446 = vmatmul.f32.gmra.mxu0 %v1406
        %v1447 = vpop.f32.mrf.mxu0
        %v1448 = vadd.f32 0.0, %v1447
        %1449 = vmatmul.f32.gmra.mxu0 %v1407
        %v1450 = vpop.f32.mrf.mxu0
        %v1451 = vadd.f32 0.0, %v1450
        %1452 = vmatmul.f32.gmra.mxu0 %v1408
        %v1453 = vpop.f32.mrf.mxu0
        %v1454 = vadd.f32 0.0, %v1453
        %1455 = vmatmul.f32.gmra.mxu0 %v1409
        %v1456 = vpop.f32.mrf.mxu0
        %v1457 = vadd.f32 0.0, %v1456
        %1458 = vmatmul.f32.gmra.mxu0 %v1410
        %v1459 = vpop.f32.mrf.mxu0
        %v1460 = vadd.f32 0.0, %v1459
        %1461 = vmatmul.f32.gmra.mxu0 %v1411
        %v1462 = vpop.f32.mrf.mxu0
        %v1463 = vadd.f32 0.0, %v1462
        %1464 = vmatmul.f32.gmra.mxu0 %v1412
        %v1465 = vpop.f32.mrf.mxu0
        %v1466 = vadd.f32 0.0, %v1465
        %1467 = vmatmul.f32.gmra.mxu0 %v1413
        %v1468 = vpop.f32.mrf.mxu0
        %v1469 = vadd.f32 0.0, %v1468
        %1470 = vmatmul.f32.gmra.mxu0 %v1414
        %v1471 = vpop.f32.mrf.mxu0
        %v1472 = vadd.f32 0.0, %v1471
        %1473 = vmatmul.f32.gmra.mxu0 %v1415
        %v1474 = vpop.f32.mrf.mxu0
        %v1475 = vadd.f32 0.0, %v1474
        %1476 = vmatmul.f32.gmra.mxu0 %v1416
        %v1477 = vpop.f32.mrf.mxu0
        %v1478 = vadd.f32 0.0, %v1477
        %1479 = vmatmul.f32.gmra.mxu0 %v1417
        %v1480 = vpop.f32.mrf.mxu0
        %v1481 = vadd.f32 0.0, %v1480
        %1482 = vdwg.mxu0
        %v1483 = vsub.f32 %v1323, %v1436
        %v1484 = vsub.f32 %v1326, %v1439
        %v1485 = vsub.f32 %v1329, %v1442
        %v1486 = vsub.f32 %v1332, %v1445
        %v1487 = vsub.f32 %v1335, %v1448
        %v1488 = vsub.f32 %v1338, %v1451
        %v1489 = vsub.f32 %v1341, %v1454
        %v1490 = vsub.f32 %v1344, %v1457
        %v1491 = vsub.f32 %v1347, %v1460
        %v1492 = vsub.f32 %v1350, %v1463
        %v1493 = vsub.f32 %v1353, %v1466
        %v1494 = vsub.f32 %v1356, %v1469
        %v1495 = vsub.f32 %v1359, %v1472
        %v1496 = vsub.f32 %v1362, %v1475
        %v1497 = vsub.f32 %v1365, %v1478
        %v1498 = vsub.f32 %v1368, %v1481
        %v1499 = vadd.f32 %v1209, %v1483
        %v1500 = vadd.f32 %v1210, %v1484
        %v1501 = vadd.f32 %v1211, %v1485
        %v1502 = vadd.f32 %v1212, %v1486
        %v1503 = vadd.f32 %v1213, %v1487
        %v1504 = vadd.f32 %v1214, %v1488
        %v1505 = vadd.f32 %v1215, %v1489
        %v1506 = vadd.f32 %v1216, %v1490
        %v1507 = vadd.f32 %v1217, %v1491
        %v1508 = vadd.f32 %v1218, %v1492
        %v1509 = vadd.f32 %v1219, %v1493
        %v1510 = vadd.f32 %v1220, %v1494
        %v1511 = vadd.f32 %v1221, %v1495
        %v1512 = vadd.f32 %v1222, %v1496
        %v1513 = vadd.f32 %v1223, %v1497
        %v1514 = vadd.f32 %v1224, %v1498
        %1515 = vst [vmem:[%s383] sm:$0xff] %v1499
        %1516 = vst [vmem:[%s383 + $0x8] sm:$0xff] %v1500
        %1517 = vst [vmem:[%s383 + $0x10] sm:$0xff] %v1501
        %1518 = vst [vmem:[%s383 + $0x18] sm:$0xff] %v1502
        %1519 = vst [vmem:[%s383 + $0x20] sm:$0xff] %v1503
        %1520 = vst [vmem:[%s383 + $0x28] sm:$0xff] %v1504
        %1521 = vst [vmem:[%s383 + $0x30] sm:$0xff] %v1505
        %1522 = vst [vmem:[%s383 + $0x38] sm:$0xff] %v1506
        %1523 = vst [vmem:[%s383 + $0x40] sm:$0xff] %v1507
        %1524 = vst [vmem:[%s383 + $0x48] sm:$0xff] %v1508
        %1525 = vst [vmem:[%s383 + $0x50] sm:$0xff] %v1509
        %1526 = vst [vmem:[%s383 + $0x58] sm:$0xff] %v1510
        %1527 = vst [vmem:[%s383 + $0x60] sm:$0xff] %v1511
        %1528 = vst [vmem:[%s383 + $0x68] sm:$0xff] %v1512
        %1529 = vst [vmem:[%s383 + $0x70] sm:$0xff] %v1513
        %1530 = vst [vmem:[%s383 + $0x78] sm:$0xff] %v1514
        // Predicated region
        $region57: #{tpu_custom_call.1} parent=35 // pred_check
          %p1531 = pneg %p386
        $region58: #{tpu_custom_call.1} parent=35 // pred_check_branch
          %1533 = sbr.rel (%p1531) target = $region60
        $region59: #{tpu_custom_call.1} parent=35 // pred_region
          %1534 = vxpose.xlu0.b32.start [1/16] %v411, 128
          %1535 = vxpose.xlu0.b32.cont [2/16] %v412, 128
          %1536 = vxpose.xlu0.b32.cont [3/16] %v413, 128
          %1537 = vxpose.xlu0.b32.cont [4/16] %v414, 128
          %1538 = vxpose.xlu0.b32.cont [5/16] %v415, 128
          %1539 = vxpose.xlu0.b32.cont [6/16] %v416, 128
          %1540 = vxpose.xlu0.b32.cont [7/16] %v417, 128
          %1541 = vxpose.xlu0.b32.cont [8/16] %v418, 128
          %1542 = vxpose.xlu0.b32.cont [9/16] %v419, 128
          %1543 = vxpose.xlu0.b32.cont [10/16] %v420, 128
          %1544 = vxpose.xlu0.b32.cont [11/16] %v421, 128
          %1545 = vxpose.xlu0.b32.cont [12/16] %v422, 128
          %1546 = vxpose.xlu0.b32.cont [13/16] %v423, 128
          %1547 = vxpose.xlu0.b32.cont [14/16] %v424, 128
          %1548 = vxpose.xlu0.b32.cont [15/16] %v425, 128
          %1549 = vxpose.xlu0.b32.end [16/16] %v426, 128
          %v1550 = vpop.trf.xlu0
          %v1551 = vpop.trf.xlu0
          %v1552 = vpop.trf.xlu0
          %v1553 = vpop.trf.xlu0
          %v1554 = vpop.trf.xlu0
          %v1555 = vpop.trf.xlu0
          %v1556 = vpop.trf.xlu0
          %v1557 = vpop.trf.xlu0
          %v1558 = vpop.trf.xlu0
          %v1559 = vpop.trf.xlu0
          %v1560 = vpop.trf.xlu0
          %v1561 = vpop.trf.xlu0
          %v1562 = vpop.trf.xlu0
          %v1563 = vpop.trf.xlu0
          %v1564 = vpop.trf.xlu0
          %v1565 = vpop.trf.xlu0
          %1566 = vmatpush.msra.mxu0 %v426
          %1567 = vmatpush.msra.mxu0 %v425
          %1568 = vmatpush.msra.mxu0 %v424
          %1569 = vmatpush.msra.mxu0 %v423
          %1570 = vmatpush.msra.mxu0 %v422
          %1571 = vmatpush.msra.mxu0 %v421
          %1572 = vmatpush.msra.mxu0 %v420
          %1573 = vmatpush.msra.mxu0 %v419
          %1574 = vmatpush.msra.mxu0 %v418
          %1575 = vmatpush.msra.mxu0 %v417
          %1576 = vmatpush.msra.mxu0 %v416
          %1577 = vmatpush.msra.mxu0 %v415
          %1578 = vmatpush.msra.mxu0 %v414
          %1579 = vmatpush.msra.mxu0 %v413
          %1580 = vmatpush.msra.mxu0 %v412
          %1581 = vmatpush.msra.mxu0 %v411
          %1582 = vmatmul.f32.gmra.mxu0 %v1550
          %v1583 = vpop.f32.mrf.mxu0
          %v1584 = vadd.f32 0.0, %v1583
          %1585 = vmatmul.f32.gmra.mxu0 %v1551
          %v1586 = vpop.f32.mrf.mxu0
          %v1587 = vadd.f32 0.0, %v1586
          %1588 = vmatmul.f32.gmra.mxu0 %v1552
          %v1589 = vpop.f32.mrf.mxu0
          %v1590 = vadd.f32 0.0, %v1589
          %1591 = vmatmul.f32.gmra.mxu0 %v1553
          %v1592 = vpop.f32.mrf.mxu0
          %v1593 = vadd.f32 0.0, %v1592
          %1594 = vmatmul.f32.gmra.mxu0 %v1554
          %v1595 = vpop.f32.mrf.mxu0
          %v1596 = vadd.f32 0.0, %v1595
          %1597 = vmatmul.f32.gmra.mxu0 %v1555
          %v1598 = vpop.f32.mrf.mxu0
          %v1599 = vadd.f32 0.0, %v1598
          %1600 = vmatmul.f32.gmra.mxu0 %v1556
          %v1601 = vpop.f32.mrf.mxu0
          %v1602 = vadd.f32 0.0, %v1601
          %1603 = vmatmul.f32.gmra.mxu0 %v1557
          %v1604 = vpop.f32.mrf.mxu0
          %v1605 = vadd.f32 0.0, %v1604
          %1606 = vmatmul.f32.gmra.mxu0 %v1558
          %v1607 = vpop.f32.mrf.mxu0
          %v1608 = vadd.f32 0.0, %v1607
          %1609 = vmatmul.f32.gmra.mxu0 %v1559
          %v1610 = vpop.f32.mrf.mxu0
          %v1611 = vadd.f32 0.0, %v1610
          %1612 = vmatmul.f32.gmra.mxu0 %v1560
          %v1613 = vpop.f32.mrf.mxu0
          %v1614 = vadd.f32 0.0, %v1613
          %1615 = vmatmul.f32.gmra.mxu0 %v1561
          %v1616 = vpop.f32.mrf.mxu0
          %v1617 = vadd.f32 0.0, %v1616
          %1618 = vmatmul.f32.gmra.mxu0 %v1562
          %v1619 = vpop.f32.mrf.mxu0
          %v1620 = vadd.f32 0.0, %v1619
          %1621 = vmatmul.f32.gmra.mxu0 %v1563
          %v1622 = vpop.f32.mrf.mxu0
          %v1623 = vadd.f32 0.0, %v1622
          %1624 = vmatmul.f32.gmra.mxu0 %v1564
          %v1625 = vpop.f32.mrf.mxu0
          %v1626 = vadd.f32 0.0, %v1625
          %1627 = vmatmul.f32.gmra.mxu0 %v1565
          %v1628 = vpop.f32.mrf.mxu0
          %v1629 = vadd.f32 0.0, %v1628
          %1630 = vdwg.mxu0
          %v1631 = vld [vmem:[%s383] sm:$0xff]
          %v1632 = vld [vmem:[%s383 + $0x8] sm:$0xff]
          %v1633 = vld [vmem:[%s383 + $0x10] sm:$0xff]
          %v1634 = vld [vmem:[%s383 + $0x18] sm:$0xff]
          %v1635 = vld [vmem:[%s383 + $0x20] sm:$0xff]
          %v1636 = vld [vmem:[%s383 + $0x28] sm:$0xff]
          %v1637 = vld [vmem:[%s383 + $0x30] sm:$0xff]
          %v1638 = vld [vmem:[%s383 + $0x38] sm:$0xff]
          %v1639 = vld [vmem:[%s383 + $0x40] sm:$0xff]
          %v1640 = vld [vmem:[%s383 + $0x48] sm:$0xff]
          %v1641 = vld [vmem:[%s383 + $0x50] sm:$0xff]
          %v1642 = vld [vmem:[%s383 + $0x58] sm:$0xff]
          %v1643 = vld [vmem:[%s383 + $0x60] sm:$0xff]
          %v1644 = vld [vmem:[%s383 + $0x68] sm:$0xff]
          %v1645 = vld [vmem:[%s383 + $0x70] sm:$0xff]
          %v1646 = vld [vmem:[%s383 + $0x78] sm:$0xff]
          %v1647 = vld [vmem:[#allocation3] sm:$0x1]
          %v1649 = vperm.slane %v1647, 0
          %1650 = vset.pattern.permute.xlu0 0
          %1651 = vperm.xlu0 %1650, %v1649
          %v1652 = vpop.permute.xlu0 %1651
          %v1654 = vmul.f32 %v1652, %v1584
          %v1655 = vmul.f32 %v1652, %v1587
          %v1656 = vmul.f32 %v1652, %v1590
          %v1657 = vmul.f32 %v1652, %v1593
          %v1658 = vmul.f32 %v1652, %v1596
          %v1659 = vmul.f32 %v1652, %v1599
          %v1660 = vmul.f32 %v1652, %v1602
          %v1661 = vmul.f32 %v1652, %v1605
          %v1662 = vmul.f32 %v1652, %v1608
          %v1663 = vmul.f32 %v1652, %v1611
          %v1664 = vmul.f32 %v1652, %v1614
          %v1665 = vmul.f32 %v1652, %v1617
          %v1666 = vmul.f32 %v1652, %v1620
          %v1667 = vmul.f32 %v1652, %v1623
          %v1668 = vmul.f32 %v1652, %v1626
          %v1669 = vmul.f32 %v1652, %v1629
          %v1670 = vsub.f32 %v1631, %v1654
          %v1671 = vsub.f32 %v1632, %v1655
          %v1672 = vsub.f32 %v1633, %v1656
          %v1673 = vsub.f32 %v1634, %v1657
          %v1674 = vsub.f32 %v1635, %v1658
          %v1675 = vsub.f32 %v1636, %v1659
          %v1676 = vsub.f32 %v1637, %v1660
          %v1677 = vsub.f32 %v1638, %v1661
          %v1678 = vsub.f32 %v1639, %v1662
          %v1679 = vsub.f32 %v1640, %v1663
          %v1680 = vsub.f32 %v1641, %v1664
          %v1681 = vsub.f32 %v1642, %v1665
          %v1682 = vsub.f32 %v1643, %v1666
          %v1683 = vsub.f32 %v1644, %v1667
          %v1684 = vsub.f32 %v1645, %v1668
          %v1685 = vsub.f32 %v1646, %v1669
          %1686 = vst [vmem:[%s383] sm:$0xff] %v1670
          %1687 = vst [vmem:[%s383 + $0x8] sm:$0xff] %v1671
          %1688 = vst [vmem:[%s383 + $0x10] sm:$0xff] %v1672
          %1689 = vst [vmem:[%s383 + $0x18] sm:$0xff] %v1673
          %1690 = vst [vmem:[%s383 + $0x20] sm:$0xff] %v1674
          %1691 = vst [vmem:[%s383 + $0x28] sm:$0xff] %v1675
          %1692 = vst [vmem:[%s383 + $0x30] sm:$0xff] %v1676
          %1693 = vst [vmem:[%s383 + $0x38] sm:$0xff] %v1677
          %1694 = vst [vmem:[%s383 + $0x40] sm:$0xff] %v1678
          %1695 = vst [vmem:[%s383 + $0x48] sm:$0xff] %v1679
          %1696 = vst [vmem:[%s383 + $0x50] sm:$0xff] %v1680
          %1697 = vst [vmem:[%s383 + $0x58] sm:$0xff] %v1681
          %1698 = vst [vmem:[%s383 + $0x60] sm:$0xff] %v1682
          %1699 = vst [vmem:[%s383 + $0x68] sm:$0xff] %v1683
          %1700 = vst [vmem:[%s383 + $0x70] sm:$0xff] %v1684
          %1701 = vst [vmem:[%s383 + $0x78] sm:$0xff] %v1685
          %v1702 = vlaneseq
          %v1703 = vand.u32 %v1702, 127
          %vm1704 = vcmp.eq.s32.totalorder %v1703, 0
          %v1705 = vld [vmem:[#allocation2] sm:$0x1]
          %vm1706 = vcmp.eq.s32.totalorder %v1703, 1
          %v1707 = vld [vmem:[#allocation3] sm:$0x1]
          %1709 = vset.pattern.permute.xlu0 0
          %1710 = vperm.xlu0 %1709, %v1707
          %v1711 = vpop.permute.xlu0 %1710
          %v1713 = vperm.slane %v1711, 0
          %v1714 = vsel %vm1706, %v1713, 0.0
          %1716 = vset.pattern.permute.xlu0 0
          %1717 = vperm.xlu0 %1716, %v1705
          %v1718 = vpop.permute.xlu0 %1717
          %v1720 = vperm.slane %v1718, 0
          %v1721 = vsel %vm1704, %v1720, %v1714
          %1722 = vst [vmem:[%s376] sm:$0x1] %v1721
        $region60: #{tpu_custom_call.1} parent=35 // pred_fallthru
          _
        %s1723 = sand.u32 %s155, 1
        %s1724 = scalar_lea.sflag [#allocation6], %s1723
        %s1725 = sand.u32 %s155, 1
        %s1726 = scalar_lea.vmem [#allocation12], %s1725
        %s1727 = sand.u32 %s31, 1
        %s1728 = scalar_lea.sflag [#allocation14], %s1727
        %s1729 = sand.u32 %s181, 1
        %s1730 = scalar_lea.vmem [#allocation13], %s1729
        %s1731 = sand.u32 %s31, 1
        %s1732 = scalar_lea.sflag [#allocation14], %s1731
        %s1733 = sand.u32 %s207, 1
        %s1734 = smul.addr %s1733, 128
        %s1735 = scalar_lea.vmem [#allocation15], %s1734
        // Predicated region
        $region61: #{tpu_custom_call.1} parent=35 // pred_check
          %p1736 = pneg %p165
        $region62: #{tpu_custom_call.1} parent=35 // pred_check_branch
          %1738 = sbr.rel (%p1736) target = $region64
        $region63: #{tpu_custom_call.1} parent=35 // pred_region
          %1740 = vsyncadd %s1724, 0
          %s1741 = scalar_lea.hbm %s4, %s35
          %s1743 = sshll.u32 %s1726, 4
          %s1744 = int_to_ptr.vmem [resolvable:$true] %s1743
          %s1745 = sshll.u32 %s1741, 4
          %s1746 = int_to_ptr.hbm [resolvable:$true] %s1745
          %1748 = dma.vmem_to_hbm [thread:$0]  %s1744, 16, %s1746, %s1724
        $region64: #{tpu_custom_call.1} parent=35 // pred_fallthru
          _
        // Predicated region
        $region65: #{tpu_custom_call.1} parent=35 // pred_check
          %p1749 = pneg %p191
        $region66: #{tpu_custom_call.1} parent=35 // pred_check_branch
          %1751 = sbr.rel (%p1749) target = $region68
        $region67: #{tpu_custom_call.1} parent=35 // pred_region
          %1753 = vsyncadd %s1728, 0
          %s1754 = scalar_lea.hbm %s5, %s35
          %s1756 = sshll.u32 %s1730, 4
          %s1757 = int_to_ptr.vmem [resolvable:$true] %s1756
          %s1758 = sshll.u32 %s1754, 4
          %s1759 = int_to_ptr.hbm [resolvable:$true] %s1758
          %1761 = dma.vmem_to_hbm [thread:$0]  %s1757, 16, %s1759, %s1728
        $region68: #{tpu_custom_call.1} parent=35 // pred_fallthru
          _
        // Predicated region
        $region69: #{tpu_custom_call.1} parent=35 // pred_check
          %p1762 = pneg %p217
        $region70: #{tpu_custom_call.1} parent=35 // pred_check_branch
          %1764 = sbr.rel (%p1762) target = $region72
        $region71: #{tpu_custom_call.1} parent=35 // pred_region
          %1766 = vsyncadd %s1732, 0
          %s1767 = smul.addr %s35, 16
          %s1768 = smul.addr %s1767, 8
          %s1769 = scalar_lea.hbm %s6, %s1768
          %s1770 = sshll.u32 %s1735, 4
          %s1771 = int_to_ptr.vmem [resolvable:$true] %s1770
          %s1772 = sshll.u32 %s1769, 4
          %s1773 = int_to_ptr.hbm [resolvable:$true] %s1772
          %1778 = dma.vmem_to_hbm [thread:$0]  %s1771, 2048, %s1773, %s1732, 128, 128, 8
        $region72: #{tpu_custom_call.1} parent=35 // pred_fallthru
          _
      $region36: #{tpu_custom_call.1} parent=5 // pred_fallthru
        _
      %p1779 = scmp.le.s32.totalorder 2, %s26
      // Predicated region
      $region73: #{tpu_custom_call.1} parent=5 // pred_check
        %p1780 = pneg %p1779
      $region74: #{tpu_custom_call.1} parent=5 // pred_check_branch
        %1782 = sbr.rel (%p1780) target = $region76
      $region75: #{tpu_custom_call.1} parent=5 // pred_region
        %s1783 = ssub.s32 %s26, 2
        // Predicated region
        $region77: #{tpu_custom_call.1} parent=75 // pred_check
          %p1784 = pneg %p171
        $region78: #{tpu_custom_call.1} parent=75 // pred_check_branch
          %1786 = sbr.rel (%p1784) target = $region80
        $region79: #{tpu_custom_call.1} parent=75 // pred_region
          %s1787 = sand.u32 %s156, 1
          %s1788 = scalar_lea.sflag [#allocation6], %s1787
          %s1789 = sand.u32 %s156, 1
          %s1790 = scalar_lea.vmem [#allocation12], %s1789
          %1792 = dma.done %s1788, 16
        $region80: #{tpu_custom_call.1} parent=75 // pred_fallthru
          _
        // Predicated region
        $region81: #{tpu_custom_call.1} parent=75 // pred_check
          %p1793 = pneg %p197
        $region82: #{tpu_custom_call.1} parent=75 // pred_check_branch
          %1795 = sbr.rel (%p1793) target = $region84
        $region83: #{tpu_custom_call.1} parent=75 // pred_region
          %s1796 = sand.u32 %s32, 1
          %s1797 = scalar_lea.sflag [#allocation14], %s1796
          %s1798 = sand.u32 %s182, 1
          %s1799 = scalar_lea.vmem [#allocation13], %s1798
          %1801 = dma.done %s1797, 16
        $region84: #{tpu_custom_call.1} parent=75 // pred_fallthru
          _
        // Predicated region
        $region85: #{tpu_custom_call.1} parent=75 // pred_check
          %p1802 = pneg %p223
        $region86: #{tpu_custom_call.1} parent=75 // pred_check_branch
          %1804 = sbr.rel (%p1802) target = $region88
        $region87: #{tpu_custom_call.1} parent=75 // pred_region
          %s1805 = sand.u32 %s32, 1
          %s1806 = scalar_lea.sflag [#allocation14], %s1805
          %s1807 = sand.u32 %s208, 1
          %s1808 = smul.addr %s1807, 128
          %s1809 = scalar_lea.vmem [#allocation15], %s1808
          %1811 = dma.done %s1806, 2048
        $region88: #{tpu_custom_call.1} parent=75 // pred_fallthru
          _
      $region76: #{tpu_custom_call.1} parent=5 // pred_fallthru
        _
    $region6: #{tpu_custom_call.1} parent=1 // loop_footer
      %s30 = sadd.s32 1, %s26
    $region7: #{tpu_custom_call.1} parent=1 // loop_footer_branch
      %25 = sbr.rel target = $region3
    $region8: #{tpu_custom_call.1} parent=1 // loop_exit
      _
    %1812 = vsyncpa [#allocation5], 1
    %s1813 = scalar_lea.sflag [#allocation5], 1
    %1814 = vsyncpa %s1813, 1
    %1815 = vsyncpa [#allocation8], 1
    %s1816 = scalar_lea.sflag [#allocation8], 1
    %1817 = vsyncpa %s1816, 1
    %1818 = vsyncpa [#allocation11], 1
    %1819 = vsyncpa [#allocation6], 1
    %s1820 = scalar_lea.sflag [#allocation6], 1
    %1821 = vsyncpa %s1820, 1
    %1822 = vsyncpa [#allocation14], 1
    %s1823 = scalar_lea.sflag [#allocation14], 1
    %1824 = vsyncpa %s1823, 1

</llo_original>
